<compile_context>
chip_gen: v7x
topology: tpu7x:2x2x1
jax: 0.10.0
libtpu: 0.0.40
codegen_flags: <defaults>
</compile_context>

<pallas_src>
import jax
import jax.numpy as jnp
import numpy as np
from jax.experimental import pallas as pl
from jax.experimental.pallas import tpu as pltpu


# ---------------------------------------------------------------------------
# Config (mirrors the PyTorch module's config object)
# ---------------------------------------------------------------------------
INPUT_SIZE = 8
HIDDEN = 32
LSTM_LAYERS = 2
OUTPUT_SIZE = 4
DROPOUT_RATE = 0.0   # inter-layer dropout; identity in eval mode
OP = 2               # forward branch: linear(lstm_out[:, -1, :])

BATCH = 2
SEQ = 8
BATCH_PAD = 8        # sublane-padded batch (full (8,128) vregs everywhere)
OUT_PAD = 128        # lane-dense padded output width for the linear head


# ---------------------------------------------------------------------------
# Pallas kernel: full LSTM recurrence (2 layers, pipelined) + final Linear
#
# Gate order INSIDE the kernel is [i, f, o, g]; the g-gate weight/bias
# columns were pre-scaled by 2 in prepare_params so tanh(x) = 2*sigmoid(2x)-1
# lets one full-vreg sigmoid cover all four gates.
# ---------------------------------------------------------------------------
def lstm_net_kernel(x_ref,                  # (T*Bp, In)   time-major, padded
                    wih0_ref, b0_ref,       # (In, 4H), (1, 4H)
                    wa_ref,                 # (H, 8H)  [whh0 | wih1]
                    whh1_ref, b1_ref,       # (H, 4H),  (1, 4H)
                    wlin_ref, blin_ref,     # (H, OUT_PAD), (1, OUT_PAD)
                    out_ref):               # (Bp, OUT_PAD)
    Bp = out_ref.shape[0]
    TB = x_ref.shape[0]
    T = TB // Bp
    H = whh1_ref.shape[0]

    wa = wa_ref[...]
    whh1 = whh1_ref[...]
    b1 = b1_ref[...]

    # Hoisted layer-0 input projection for ALL timesteps: one matmul, off the
    # recurrent critical path.  Reshape so each per-step read is an aligned
    # full (Bp, 4H) = (8, 128) vreg tile.
    gx0 = (jnp.dot(x_ref[...], wih0_ref[...],
                   preferred_element_type=jnp.float32)
           + b0_ref[...])                                   # (T*Bp, 4H)
    gx0 = gx0.reshape(T, Bp, 4 * H)

    def gates_to_hc(gates, c):
        # gate layout: [i | f | o | 2*g_pre]
        # one sigmoid over the full (Bp, 4H) vreg; g = tanh(g_pre) = 2*s - 1
        s = jax.nn.sigmoid(gates)
        i_g = s[:, 0 * H:1 * H]
        f_g = s[:, 1 * H:2 * H]
        o_g = s[:, 2 * H:3 * H]
        g_g = 2.0 * s[:, 3 * H:4 * H] - 1.0
        c_new = f_g * c + i_g * g_g
        h_new = o_g * jnp.tanh(c_new)
        return h_new, c_new

    zH = jnp.zeros((Bp, H), jnp.float32)
    c0, c1, h1 = zH, zH, zH
    # Carried cross-step products (h_{-1} == 0 -> zero carries).
    a_carry = jnp.zeros((Bp, 8 * H), jnp.float32)   # h0_{t-1} @ [whh0 | wih1]
    b_carry = jnp.zeros((Bp, 4 * H), jnp.float32)   # h1_{t-1} @ whh1

    # Fully unrolled at trace time (T is small and static).
    for t in range(T):
        # Layer 0 at step t: precomputed input proj + carried recurrent term.
        h0, c0 = gates_to_hc(gx0[t] + a_carry[:, :4 * H], c0)

        # Single chained matmul on the h0 dependence path:
        #   first 4H lanes -> layer-0 recurrent term for step t+1
        #   last  4H lanes -> layer-1 input projection for step t
        a_carry = jnp.dot(h0, wa, preferred_element_type=jnp.float32)

        # TODO(synk): inter-layer dropout only applies in training mode;
        # eval-mode (identity) semantics are implemented here.
        # Layer 1 at step t: fresh input projection + carried recurrent term.
        h1, c1 = gates_to_hc(a_carry[:, 4 * H:] + b1 + b_carry, c1)

        # Layer-1 recurrent product for step t+1 (overlaps next step's work;
        # skipped on the last step).
        if t + 1 < T:
            b_carry = jnp.dot(h1, whh1, preferred_element_type=jnp.float32)

    # config.op == 2: Linear applied to last timestep of the top LSTM layer.
    # Output is lane-padded to 128 for an unmasked store; sliced in wrapper.
    out_ref[...] = (jnp.dot(h1, wlin_ref[...],
                            preferred_element_type=jnp.float32)
                    + blin_ref[...]).astype(out_ref.dtype)


# ---------------------------------------------------------------------------
# One-time parameter preparation (transpose / gate reorder+scale / fuse / pad)
# ---------------------------------------------------------------------------
def _reorder_and_scale_gate_cols(w_4h_cols):
    """Permute gate column blocks from PyTorch [i,f,g,o] to kernel [i,f,o,g]
    and pre-scale the g-gate columns by 2 (tanh(x) = 2*sigmoid(2x) - 1)."""
    H = HIDDEN
    return jnp.concatenate(
        [w_4h_cols[:, 0 * H:1 * H],          # i
         w_4h_cols[:, 1 * H:2 * H],          # f
         w_4h_cols[:, 3 * H:4 * H],          # o
         2.0 * w_4h_cols[:, 2 * H:3 * H]],   # g (scaled by 2)
        axis=1)


def prepare_params(params):
    """Convert PyTorch-layout params into kernel-ready arrays (call once)."""
    H = HIDDEN
    r = _reorder_and_scale_gate_cols

    wih0 = r(params["w_ih_l0"].T)                                   # (In, 4H)
    whh0 = r(params["w_hh_l0"].T)                                   # (H, 4H)
    b0 = r((params["b_ih_l0"] + params["b_hh_l0"]).reshape(1, -1))  # (1, 4H)

    wih1 = r(params["w_ih_l1"].T)                                   # (H, 4H)
    whh1 = r(params["w_hh_l1"].T)                                   # (H, 4H)
    b1 = r((params["b_ih_l1"] + params["b_hh_l1"]).reshape(1, -1))  # (1, 4H)

    # Fused per-h0 matmul weight: [whh0 | wih1]  (H, 8H).  whh1 stays separate
    # so the two layers pipeline across steps (no zero-padded blockdiag).
    wa = jnp.concatenate([whh0, wih1], axis=1)

    # Linear head, lane-padded to OUT_PAD columns.
    wlin = jnp.zeros((H, OUT_PAD), jnp.float32).at[:, :OUTPUT_SIZE].set(
        params["w_lin"].T)
    blin = jnp.zeros((1, OUT_PAD), jnp.float32).at[:, :OUTPUT_SIZE].set(
        params["b_lin"].reshape(1, -1))

    # NOTE: bf16 weights would cut MXU latency further but break the 1e-5
    # check / f32 PyTorch semantics; kept f32 on purpose.
    return (wih0, b0, wa, whh1, b1, wlin, blin)


# ---------------------------------------------------------------------------
# Wrapper: pallas_call (full-array VMEM specs, no grid; everything fits)
# ---------------------------------------------------------------------------
def lstm_net_forward(x, kparams):
    """x: (B, T, input_size) batch_first, float32.  Returns (B, OUTPUT_SIZE)."""
    B, T, In = x.shape
    Bp = BATCH_PAD

    # batch_first -> time-major, pad batch to 8 sublanes, flatten to
    # (T*Bp, In) so the kernel can hoist the layer-0 input projection into
    # one matmul and every per-step slice is (8, 128)-aligned.
    x_tm = jnp.transpose(x, (1, 0, 2))                            # (T, B, In)
    x_pad = jnp.zeros((T, Bp, In), x.dtype).at[:, :B, :].set(x_tm)
    x_flat = x_pad.reshape(T * Bp, In)

    args = (x_flat,) + tuple(kparams)
    vmem = pl.BlockSpec(memory_space=pltpu.MemorySpace.VMEM)

    out_padded = pl.pallas_call(
        lstm_net_kernel,
        out_shape=jax.ShapeDtypeStruct((Bp, OUT_PAD), jnp.float32),
        in_specs=[vmem] * len(args),
        out_specs=vmem,
    )(*args)
    return out_padded[:B, :OUTPUT_SIZE]


# ---------------------------------------------------------------------------
# Deterministic parameter init (PyTorch-style U(-1/sqrt(H), 1/sqrt(H)))
# ---------------------------------------------------------------------------
def init_params(key):
    k = 1.0 / np.sqrt(HIDDEN)
    keys = jax.random.split(key, 10)

    def u(kk, shape):
        return jax.random.uniform(kk, shape, jnp.float32, minval=-k, maxval=k)

    return {
        "w_ih_l0": u(keys[0], (4 * HIDDEN, INPUT_SIZE)),
        "w_hh_l0": u(keys[1], (4 * HIDDEN, HIDDEN)),
        "b_ih_l0": u(keys[2], (4 * HIDDEN,)),
        "b_hh_l0": u(keys[3], (4 * HIDDEN,)),
        "w_ih_l1": u(keys[4], (4 * HIDDEN, HIDDEN)),
        "w_hh_l1": u(keys[5], (4 * HIDDEN, HIDDEN)),
        "b_ih_l1": u(keys[6], (4 * HIDDEN,)),
        "b_hh_l1": u(keys[7], (4 * HIDDEN,)),
        "w_lin":   u(keys[8], (OUTPUT_SIZE, HIDDEN)),
        "b_lin":   u(keys[9], (OUTPUT_SIZE,)),
    }


# ---------------------------------------------------------------------------
# Pure-JAX reference (PyTorch gate order / layout) for a sanity check
# ---------------------------------------------------------------------------
def reference_forward(x, p):
    B, T, _ = x.shape
    H = HIDDEN

    def cell(x_t, h, c, wih, whh, bih, bhh):
        g = x_t @ wih.T + h @ whh.T + bih + bhh
        i = jax.nn.sigmoid(g[:, 0*H:1*H]); f = jax.nn.sigmoid(g[:, 1*H:2*H])
        gg = jnp.tanh(g[:, 2*H:3*H]);      o = jax.nn.sigmoid(g[:, 3*H:4*H])
        c = f * c + i * gg
        return o * jnp.tanh(c), c

    h0 = c0 = h1 = c1 = jnp.zeros((B, H), jnp.float32)
    for t in range(T):
        h0, c0 = cell(x[:, t, :], h0, c0, p["w_ih_l0"], p["w_hh_l0"],
                      p["b_ih_l0"], p["b_hh_l0"])
        h1, c1 = cell(h0, h1, c1, p["w_ih_l1"], p["w_hh_l1"],
                      p["b_ih_l1"], p["b_hh_l1"])
    return h1 @ p["w_lin"].T + p["b_lin"]


if __name__ == "__main__":
    key = jax.random.PRNGKey(0)
    kx, kp = jax.random.split(key)
    x = jax.random.normal(kx, (BATCH, SEQ, INPUT_SIZE), jnp.float32)
    params = init_params(kp)

    kernel_params = prepare_params(params)          # one-time weight prep
    out = lstm_net_forward(x, kernel_params)
    out = jax.block_until_ready(out)

    ref = reference_forward(x, params)
    np.testing.assert_allclose(np.asarray(out), np.asarray(ref),
                               rtol=1e-5, atol=1e-5)
    print("KERNEL_OK")
</pallas_src>

<mosaic_0001>
module attributes {stable_mosaic.version = 11 : i64} {
  func.func @lstm_net_kernel(%arg0: memref<64x8xf32, #tpu.memory_space<vmem>>, %arg1: memref<8x128xf32, #tpu.memory_space<vmem>>, %arg2: memref<1x128xf32, #tpu.memory_space<vmem>>, %arg3: memref<32x256xf32, #tpu.memory_space<vmem>>, %arg4: memref<32x128xf32, #tpu.memory_space<vmem>>, %arg5: memref<1x128xf32, #tpu.memory_space<vmem>>, %arg6: memref<32x128xf32, #tpu.memory_space<vmem>>, %arg7: memref<1x128xf32, #tpu.memory_space<vmem>>, %arg8: memref<8x128xf32, #tpu.memory_space<vmem>>) attributes {dimension_semantics = [], scalar_prefetch = 0 : i64, scratch_operands = 0 : i64, tpu.core_type = #tpu.core_type<tc>} {
    %c0 = arith.constant 0 : index
    %c0_0 = arith.constant 0 : index
    %0 = vector.load %arg3[%c0, %c0_0] : memref<32x256xf32, #tpu.memory_space<vmem>>, vector<32x256xf32>
    %c0_1 = arith.constant 0 : index
    %c0_2 = arith.constant 0 : index
    %1 = vector.load %arg4[%c0_1, %c0_2] : memref<32x128xf32, #tpu.memory_space<vmem>>, vector<32x128xf32>
    %c0_3 = arith.constant 0 : index
    %c0_4 = arith.constant 0 : index
    %2 = vector.load %arg5[%c0_3, %c0_4] : memref<1x128xf32, #tpu.memory_space<vmem>>, vector<1x128xf32>
    %c0_5 = arith.constant 0 : index
    %c0_6 = arith.constant 0 : index
    %3 = vector.load %arg0[%c0_5, %c0_6] : memref<64x8xf32, #tpu.memory_space<vmem>>, vector<64x8xf32>
    %c0_7 = arith.constant 0 : index
    %c0_8 = arith.constant 0 : index
    %4 = vector.load %arg1[%c0_7, %c0_8] : memref<8x128xf32, #tpu.memory_space<vmem>>, vector<8x128xf32>
    %cst = arith.constant dense<0.000000e+00> : vector<64x128xf32>
    %5 = tpu.matmul %3, %4, %cst {dimension_numbers = #tpu.dot_dimension_numbers<[1], [0], [0], [1], [0, 0, 1, 1], [], []>} : vector<64x8xf32>, vector<8x128xf32>, vector<64x128xf32> -> vector<64x128xf32>
    %c0_9 = arith.constant 0 : index
    %c0_10 = arith.constant 0 : index
    %6 = vector.load %arg2[%c0_9, %c0_10] : memref<1x128xf32, #tpu.memory_space<vmem>>, vector<1x128xf32>
    %7 = vector.broadcast %6 : vector<1x128xf32> to vector<64x128xf32>
    %8 = arith.addf %5, %7 : vector<64x128xf32>
    %9 = vector.shape_cast %8 : vector<64x128xf32> to vector<8x8x128xf32>
    %cst_11 = arith.constant 0.000000e+00 : f32
    %10 = vector.broadcast %cst_11 : f32 to vector<8x32xf32>
    %cst_12 = arith.constant 0.000000e+00 : f32
    %11 = vector.broadcast %cst_12 : f32 to vector<8x256xf32>
    %cst_13 = arith.constant 0.000000e+00 : f32
    %12 = vector.broadcast %cst_13 : f32 to vector<8x128xf32>
    %13 = vector.extract_strided_slice %9 {offsets = [0, 0, 0], sizes = [1, 8, 128], strides = [1, 1, 1]} : vector<8x8x128xf32> to vector<1x8x128xf32>
    %14 = vector.shape_cast %13 : vector<1x8x128xf32> to vector<8x128xf32>
    %15 = vector.extract_strided_slice %11 {offsets = [0, 0], sizes = [8, 128], strides = [1, 1]} : vector<8x256xf32> to vector<8x128xf32>
    %16 = arith.addf %14, %15 : vector<8x128xf32>
    %17 = arith.negf %16 : vector<8x128xf32>
    %18 = math.exp %17 : vector<8x128xf32>
    %cst_14 = arith.constant 1.000000e+00 : f32
    %19 = vector.broadcast %cst_14 : f32 to vector<8x128xf32>
    %20 = arith.addf %19, %18 : vector<8x128xf32>
    %21 = arith.divf %19, %20 : vector<8x128xf32>
    %22 = vector.extract_strided_slice %21 {offsets = [0, 0], sizes = [8, 32], strides = [1, 1]} : vector<8x128xf32> to vector<8x32xf32>
    %23 = vector.extract_strided_slice %21 {offsets = [0, 32], sizes = [8, 32], strides = [1, 1]} : vector<8x128xf32> to vector<8x32xf32>
    %24 = vector.extract_strided_slice %21 {offsets = [0, 64], sizes = [8, 32], strides = [1, 1]} : vector<8x128xf32> to vector<8x32xf32>
    %25 = vector.extract_strided_slice %21 {offsets = [0, 96], sizes = [8, 32], strides = [1, 1]} : vector<8x128xf32> to vector<8x32xf32>
    %cst_15 = arith.constant 2.000000e+00 : f32
    %26 = vector.broadcast %cst_15 : f32 to vector<8x32xf32>
    %27 = arith.mulf %26, %25 : vector<8x32xf32>
    %cst_16 = arith.constant 1.000000e+00 : f32
    %28 = vector.broadcast %cst_16 : f32 to vector<8x32xf32>
    %29 = arith.subf %27, %28 : vector<8x32xf32>
    %30 = arith.mulf %23, %10 : vector<8x32xf32>
    %31 = arith.mulf %22, %29 : vector<8x32xf32>
    %32 = arith.addf %30, %31 : vector<8x32xf32>
    %33 = math.tanh %32 : vector<8x32xf32>
    %34 = arith.mulf %24, %33 : vector<8x32xf32>
    %cst_17 = arith.constant dense<0.000000e+00> : vector<8x256xf32>
    %35 = tpu.matmul %34, %0, %cst_17 {dimension_numbers = #tpu.dot_dimension_numbers<[1], [0], [0], [1], [0, 0, 1, 1], [], []>} : vector<8x32xf32>, vector<32x256xf32>, vector<8x256xf32> -> vector<8x256xf32>
    %36 = vector.extract_strided_slice %35 {offsets = [0, 128], sizes = [8, 128], strides = [1, 1]} : vector<8x256xf32> to vector<8x128xf32>
    %37 = vector.broadcast %2 : vector<1x128xf32> to vector<8x128xf32>
    %38 = arith.addf %36, %37 : vector<8x128xf32>
    %39 = arith.addf %38, %12 : vector<8x128xf32>
    %40 = arith.negf %39 : vector<8x128xf32>
    %41 = math.exp %40 : vector<8x128xf32>
    %cst_18 = arith.constant 1.000000e+00 : f32
    %42 = vector.broadcast %cst_18 : f32 to vector<8x128xf32>
    %43 = arith.addf %42, %41 : vector<8x128xf32>
    %44 = arith.divf %42, %43 : vector<8x128xf32>
    %45 = vector.extract_strided_slice %44 {offsets = [0, 0], sizes = [8, 32], strides = [1, 1]} : vector<8x128xf32> to vector<8x32xf32>
    %46 = vector.extract_strided_slice %44 {offsets = [0, 32], sizes = [8, 32], strides = [1, 1]} : vector<8x128xf32> to vector<8x32xf32>
    %47 = vector.extract_strided_slice %44 {offsets = [0, 64], sizes = [8, 32], strides = [1, 1]} : vector<8x128xf32> to vector<8x32xf32>
    %48 = vector.extract_strided_slice %44 {offsets = [0, 96], sizes = [8, 32], strides = [1, 1]} : vector<8x128xf32> to vector<8x32xf32>
    %cst_19 = arith.constant 2.000000e+00 : f32
    %49 = vector.broadcast %cst_19 : f32 to vector<8x32xf32>
    %50 = arith.mulf %49, %48 : vector<8x32xf32>
    %cst_20 = arith.constant 1.000000e+00 : f32
    %51 = vector.broadcast %cst_20 : f32 to vector<8x32xf32>
    %52 = arith.subf %50, %51 : vector<8x32xf32>
    %53 = arith.mulf %46, %10 : vector<8x32xf32>
    %54 = arith.mulf %45, %52 : vector<8x32xf32>
    %55 = arith.addf %53, %54 : vector<8x32xf32>
    %56 = math.tanh %55 : vector<8x32xf32>
    %57 = arith.mulf %47, %56 : vector<8x32xf32>
    %cst_21 = arith.constant dense<0.000000e+00> : vector<8x128xf32>
    %58 = tpu.matmul %57, %1, %cst_21 {dimension_numbers = #tpu.dot_dimension_numbers<[1], [0], [0], [1], [0, 0, 1, 1], [], []>} : vector<8x32xf32>, vector<32x128xf32>, vector<8x128xf32> -> vector<8x128xf32>
    %59 = vector.extract_strided_slice %9 {offsets = [1, 0, 0], sizes = [1, 8, 128], strides = [1, 1, 1]} : vector<8x8x128xf32> to vector<1x8x128xf32>
    %60 = vector.shape_cast %59 : vector<1x8x128xf32> to vector<8x128xf32>
    %61 = vector.extract_strided_slice %35 {offsets = [0, 0], sizes = [8, 128], strides = [1, 1]} : vector<8x256xf32> to vector<8x128xf32>
    %62 = arith.addf %60, %61 : vector<8x128xf32>
    %63 = arith.negf %62 : vector<8x128xf32>
    %64 = math.exp %63 : vector<8x128xf32>
    %cst_22 = arith.constant 1.000000e+00 : f32
    %65 = vector.broadcast %cst_22 : f32 to vector<8x128xf32>
    %66 = arith.addf %65, %64 : vector<8x128xf32>
    %67 = arith.divf %65, %66 : vector<8x128xf32>
    %68 = vector.extract_strided_slice %67 {offsets = [0, 0], sizes = [8, 32], strides = [1, 1]} : vector<8x128xf32> to vector<8x32xf32>
    %69 = vector.extract_strided_slice %67 {offsets = [0, 32], sizes = [8, 32], strides = [1, 1]} : vector<8x128xf32> to vector<8x32xf32>
    %70 = vector.extract_strided_slice %67 {offsets = [0, 64], sizes = [8, 32], strides = [1, 1]} : vector<8x128xf32> to vector<8x32xf32>
    %71 = vector.extract_strided_slice %67 {offsets = [0, 96], sizes = [8, 32], strides = [1, 1]} : vector<8x128xf32> to vector<8x32xf32>
    %cst_23 = arith.constant 2.000000e+00 : f32
    %72 = vector.broadcast %cst_23 : f32 to vector<8x32xf32>
    %73 = arith.mulf %72, %71 : vector<8x32xf32>
    %cst_24 = arith.constant 1.000000e+00 : f32
    %74 = vector.broadcast %cst_24 : f32 to vector<8x32xf32>
    %75 = arith.subf %73, %74 : vector<8x32xf32>
    %76 = arith.mulf %69, %32 : vector<8x32xf32>
    %77 = arith.mulf %68, %75 : vector<8x32xf32>
    %78 = arith.addf %76, %77 : vector<8x32xf32>
    %79 = math.tanh %78 : vector<8x32xf32>
    %80 = arith.mulf %70, %79 : vector<8x32xf32>
    %cst_25 = arith.constant dense<0.000000e+00> : vector<8x256xf32>
    %81 = tpu.matmul %80, %0, %cst_25 {dimension_numbers = #tpu.dot_dimension_numbers<[1], [0], [0], [1], [0, 0, 1, 1], [], []>} : vector<8x32xf32>, vector<32x256xf32>, vector<8x256xf32> -> vector<8x256xf32>
    %82 = vector.extract_strided_slice %81 {offsets = [0, 128], sizes = [8, 128], strides = [1, 1]} : vector<8x256xf32> to vector<8x128xf32>
    %83 = vector.broadcast %2 : vector<1x128xf32> to vector<8x128xf32>
    %84 = arith.addf %82, %83 : vector<8x128xf32>
    %85 = arith.addf %84, %58 : vector<8x128xf32>
    %86 = arith.negf %85 : vector<8x128xf32>
    %87 = math.exp %86 : vector<8x128xf32>
    %cst_26 = arith.constant 1.000000e+00 : f32
    %88 = vector.broadcast %cst_26 : f32 to vector<8x128xf32>
    %89 = arith.addf %88, %87 : vector<8x128xf32>
    %90 = arith.divf %88, %89 : vector<8x128xf32>
    %91 = vector.extract_strided_slice %90 {offsets = [0, 0], sizes = [8, 32], strides = [1, 1]} : vector<8x128xf32> to vector<8x32xf32>
    %92 = vector.extract_strided_slice %90 {offsets = [0, 32], sizes = [8, 32], strides = [1, 1]} : vector<8x128xf32> to vector<8x32xf32>
    %93 = vector.extract_strided_slice %90 {offsets = [0, 64], sizes = [8, 32], strides = [1, 1]} : vector<8x128xf32> to vector<8x32xf32>
    %94 = vector.extract_strided_slice %90 {offsets = [0, 96], sizes = [8, 32], strides = [1, 1]} : vector<8x128xf32> to vector<8x32xf32>
    %cst_27 = arith.constant 2.000000e+00 : f32
    %95 = vector.broadcast %cst_27 : f32 to vector<8x32xf32>
    %96 = arith.mulf %95, %94 : vector<8x32xf32>
    %cst_28 = arith.constant 1.000000e+00 : f32
    %97 = vector.broadcast %cst_28 : f32 to vector<8x32xf32>
    %98 = arith.subf %96, %97 : vector<8x32xf32>
    %99 = arith.mulf %92, %55 : vector<8x32xf32>
    %100 = arith.mulf %91, %98 : vector<8x32xf32>
    %101 = arith.addf %99, %100 : vector<8x32xf32>
    %102 = math.tanh %101 : vector<8x32xf32>
    %103 = arith.mulf %93, %102 : vector<8x32xf32>
    %cst_29 = arith.constant dense<0.000000e+00> : vector<8x128xf32>
    %104 = tpu.matmul %103, %1, %cst_29 {dimension_numbers = #tpu.dot_dimension_numbers<[1], [0], [0], [1], [0, 0, 1, 1], [], []>} : vector<8x32xf32>, vector<32x128xf32>, vector<8x128xf32> -> vector<8x128xf32>
    %105 = vector.extract_strided_slice %9 {offsets = [2, 0, 0], sizes = [1, 8, 128], strides = [1, 1, 1]} : vector<8x8x128xf32> to vector<1x8x128xf32>
    %106 = vector.shape_cast %105 : vector<1x8x128xf32> to vector<8x128xf32>
    %107 = vector.extract_strided_slice %81 {offsets = [0, 0], sizes = [8, 128], strides = [1, 1]} : vector<8x256xf32> to vector<8x128xf32>
    %108 = arith.addf %106, %107 : vector<8x128xf32>
    %109 = arith.negf %108 : vector<8x128xf32>
    %110 = math.exp %109 : vector<8x128xf32>
    %cst_30 = arith.constant 1.000000e+00 : f32
    %111 = vector.broadcast %cst_30 : f32 to vector<8x128xf32>
    %112 = arith.addf %111, %110 : vector<8x128xf32>
    %113 = arith.divf %111, %112 : vector<8x128xf32>
    %114 = vector.extract_strided_slice %113 {offsets = [0, 0], sizes = [8, 32], strides = [1, 1]} : vector<8x128xf32> to vector<8x32xf32>
    %115 = vector.extract_strided_slice %113 {offsets = [0, 32], sizes = [8, 32], strides = [1, 1]} : vector<8x128xf32> to vector<8x32xf32>
    %116 = vector.extract_strided_slice %113 {offsets = [0, 64], sizes = [8, 32], strides = [1, 1]} : vector<8x128xf32> to vector<8x32xf32>
    %117 = vector.extract_strided_slice %113 {offsets = [0, 96], sizes = [8, 32], strides = [1, 1]} : vector<8x128xf32> to vector<8x32xf32>
    %cst_31 = arith.constant 2.000000e+00 : f32
    %118 = vector.broadcast %cst_31 : f32 to vector<8x32xf32>
    %119 = arith.mulf %118, %117 : vector<8x32xf32>
    %cst_32 = arith.constant 1.000000e+00 : f32
    %120 = vector.broadcast %cst_32 : f32 to vector<8x32xf32>
    %121 = arith.subf %119, %120 : vector<8x32xf32>
    %122 = arith.mulf %115, %78 : vector<8x32xf32>
    %123 = arith.mulf %114, %121 : vector<8x32xf32>
    %124 = arith.addf %122, %123 : vector<8x32xf32>
    %125 = math.tanh %124 : vector<8x32xf32>
    %126 = arith.mulf %116, %125 : vector<8x32xf32>
    %cst_33 = arith.constant dense<0.000000e+00> : vector<8x256xf32>
    %127 = tpu.matmul %126, %0, %cst_33 {dimension_numbers = #tpu.dot_dimension_numbers<[1], [0], [0], [1], [0, 0, 1, 1], [], []>} : vector<8x32xf32>, vector<32x256xf32>, vector<8x256xf32> -> vector<8x256xf32>
    %128 = vector.extract_strided_slice %127 {offsets = [0, 128], sizes = [8, 128], strides = [1, 1]} : vector<8x256xf32> to vector<8x128xf32>
    %129 = vector.broadcast %2 : vector<1x128xf32> to vector<8x128xf32>
    %130 = arith.addf %128, %129 : vector<8x128xf32>
    %131 = arith.addf %130, %104 : vector<8x128xf32>
    %132 = arith.negf %131 : vector<8x128xf32>
    %133 = math.exp %132 : vector<8x128xf32>
    %cst_34 = arith.constant 1.000000e+00 : f32
    %134 = vector.broadcast %cst_34 : f32 to vector<8x128xf32>
    %135 = arith.addf %134, %133 : vector<8x128xf32>
    %136 = arith.divf %134, %135 : vector<8x128xf32>
    %137 = vector.extract_strided_slice %136 {offsets = [0, 0], sizes = [8, 32], strides = [1, 1]} : vector<8x128xf32> to vector<8x32xf32>
    %138 = vector.extract_strided_slice %136 {offsets = [0, 32], sizes = [8, 32], strides = [1, 1]} : vector<8x128xf32> to vector<8x32xf32>
    %139 = vector.extract_strided_slice %136 {offsets = [0, 64], sizes = [8, 32], strides = [1, 1]} : vector<8x128xf32> to vector<8x32xf32>
    %140 = vector.extract_strided_slice %136 {offsets = [0, 96], sizes = [8, 32], strides = [1, 1]} : vector<8x128xf32> to vector<8x32xf32>
    %cst_35 = arith.constant 2.000000e+00 : f32
    %141 = vector.broadcast %cst_35 : f32 to vector<8x32xf32>
    %142 = arith.mulf %141, %140 : vector<8x32xf32>
    %cst_36 = arith.constant 1.000000e+00 : f32
    %143 = vector.broadcast %cst_36 : f32 to vector<8x32xf32>
    %144 = arith.subf %142, %143 : vector<8x32xf32>
    %145 = arith.mulf %138, %101 : vector<8x32xf32>
    %146 = arith.mulf %137, %144 : vector<8x32xf32>
    %147 = arith.addf %145, %146 : vector<8x32xf32>
    %148 = math.tanh %147 : vector<8x32xf32>
    %149 = arith.mulf %139, %148 : vector<8x32xf32>
    %cst_37 = arith.constant dense<0.000000e+00> : vector<8x128xf32>
    %150 = tpu.matmul %149, %1, %cst_37 {dimension_numbers = #tpu.dot_dimension_numbers<[1], [0], [0], [1], [0, 0, 1, 1], [], []>} : vector<8x32xf32>, vector<32x128xf32>, vector<8x128xf32> -> vector<8x128xf32>
    %151 = vector.extract_strided_slice %9 {offsets = [3, 0, 0], sizes = [1, 8, 128], strides = [1, 1, 1]} : vector<8x8x128xf32> to vector<1x8x128xf32>
    %152 = vector.shape_cast %151 : vector<1x8x128xf32> to vector<8x128xf32>
    %153 = vector.extract_strided_slice %127 {offsets = [0, 0], sizes = [8, 128], strides = [1, 1]} : vector<8x256xf32> to vector<8x128xf32>
    %154 = arith.addf %152, %153 : vector<8x128xf32>
    %155 = arith.negf %154 : vector<8x128xf32>
    %156 = math.exp %155 : vector<8x128xf32>
    %cst_38 = arith.constant 1.000000e+00 : f32
    %157 = vector.broadcast %cst_38 : f32 to vector<8x128xf32>
    %158 = arith.addf %157, %156 : vector<8x128xf32>
    %159 = arith.divf %157, %158 : vector<8x128xf32>
    %160 = vector.extract_strided_slice %159 {offsets = [0, 0], sizes = [8, 32], strides = [1, 1]} : vector<8x128xf32> to vector<8x32xf32>
    %161 = vector.extract_strided_slice %159 {offsets = [0, 32], sizes = [8, 32], strides = [1, 1]} : vector<8x128xf32> to vector<8x32xf32>
    %162 = vector.extract_strided_slice %159 {offsets = [0, 64], sizes = [8, 32], strides = [1, 1]} : vector<8x128xf32> to vector<8x32xf32>
    %163 = vector.extract_strided_slice %159 {offsets = [0, 96], sizes = [8, 32], strides = [1, 1]} : vector<8x128xf32> to vector<8x32xf32>
    %cst_39 = arith.constant 2.000000e+00 : f32
    %164 = vector.broadcast %cst_39 : f32 to vector<8x32xf32>
    %165 = arith.mulf %164, %163 : vector<8x32xf32>
    %cst_40 = arith.constant 1.000000e+00 : f32
    %166 = vector.broadcast %cst_40 : f32 to vector<8x32xf32>
    %167 = arith.subf %165, %166 : vector<8x32xf32>
    %168 = arith.mulf %161, %124 : vector<8x32xf32>
    %169 = arith.mulf %160, %167 : vector<8x32xf32>
    %170 = arith.addf %168, %169 : vector<8x32xf32>
    %171 = math.tanh %170 : vector<8x32xf32>
    %172 = arith.mulf %162, %171 : vector<8x32xf32>
    %cst_41 = arith.constant dense<0.000000e+00> : vector<8x256xf32>
    %173 = tpu.matmul %172, %0, %cst_41 {dimension_numbers = #tpu.dot_dimension_numbers<[1], [0], [0], [1], [0, 0, 1, 1], [], []>} : vector<8x32xf32>, vector<32x256xf32>, vector<8x256xf32> -> vector<8x256xf32>
    %174 = vector.extract_strided_slice %173 {offsets = [0, 128], sizes = [8, 128], strides = [1, 1]} : vector<8x256xf32> to vector<8x128xf32>
    %175 = vector.broadcast %2 : vector<1x128xf32> to vector<8x128xf32>
    %176 = arith.addf %174, %175 : vector<8x128xf32>
    %177 = arith.addf %176, %150 : vector<8x128xf32>
    %178 = arith.negf %177 : vector<8x128xf32>
    %179 = math.exp %178 : vector<8x128xf32>
    %cst_42 = arith.constant 1.000000e+00 : f32
    %180 = vector.broadcast %cst_42 : f32 to vector<8x128xf32>
    %181 = arith.addf %180, %179 : vector<8x128xf32>
    %182 = arith.divf %180, %181 : vector<8x128xf32>
    %183 = vector.extract_strided_slice %182 {offsets = [0, 0], sizes = [8, 32], strides = [1, 1]} : vector<8x128xf32> to vector<8x32xf32>
    %184 = vector.extract_strided_slice %182 {offsets = [0, 32], sizes = [8, 32], strides = [1, 1]} : vector<8x128xf32> to vector<8x32xf32>
    %185 = vector.extract_strided_slice %182 {offsets = [0, 64], sizes = [8, 32], strides = [1, 1]} : vector<8x128xf32> to vector<8x32xf32>
    %186 = vector.extract_strided_slice %182 {offsets = [0, 96], sizes = [8, 32], strides = [1, 1]} : vector<8x128xf32> to vector<8x32xf32>
    %cst_43 = arith.constant 2.000000e+00 : f32
    %187 = vector.broadcast %cst_43 : f32 to vector<8x32xf32>
    %188 = arith.mulf %187, %186 : vector<8x32xf32>
    %cst_44 = arith.constant 1.000000e+00 : f32
    %189 = vector.broadcast %cst_44 : f32 to vector<8x32xf32>
    %190 = arith.subf %188, %189 : vector<8x32xf32>
    %191 = arith.mulf %184, %147 : vector<8x32xf32>
    %192 = arith.mulf %183, %190 : vector<8x32xf32>
    %193 = arith.addf %191, %192 : vector<8x32xf32>
    %194 = math.tanh %193 : vector<8x32xf32>
    %195 = arith.mulf %185, %194 : vector<8x32xf32>
    %cst_45 = arith.constant dense<0.000000e+00> : vector<8x128xf32>
    %196 = tpu.matmul %195, %1, %cst_45 {dimension_numbers = #tpu.dot_dimension_numbers<[1], [0], [0], [1], [0, 0, 1, 1], [], []>} : vector<8x32xf32>, vector<32x128xf32>, vector<8x128xf32> -> vector<8x128xf32>
    %197 = vector.extract_strided_slice %9 {offsets = [4, 0, 0], sizes = [1, 8, 128], strides = [1, 1, 1]} : vector<8x8x128xf32> to vector<1x8x128xf32>
    %198 = vector.shape_cast %197 : vector<1x8x128xf32> to vector<8x128xf32>
    %199 = vector.extract_strided_slice %173 {offsets = [0, 0], sizes = [8, 128], strides = [1, 1]} : vector<8x256xf32> to vector<8x128xf32>
    %200 = arith.addf %198, %199 : vector<8x128xf32>
    %201 = arith.negf %200 : vector<8x128xf32>
    %202 = math.exp %201 : vector<8x128xf32>
    %cst_46 = arith.constant 1.000000e+00 : f32
    %203 = vector.broadcast %cst_46 : f32 to vector<8x128xf32>
    %204 = arith.addf %203, %202 : vector<8x128xf32>
    %205 = arith.divf %203, %204 : vector<8x128xf32>
    %206 = vector.extract_strided_slice %205 {offsets = [0, 0], sizes = [8, 32], strides = [1, 1]} : vector<8x128xf32> to vector<8x32xf32>
    %207 = vector.extract_strided_slice %205 {offsets = [0, 32], sizes = [8, 32], strides = [1, 1]} : vector<8x128xf32> to vector<8x32xf32>
    %208 = vector.extract_strided_slice %205 {offsets = [0, 64], sizes = [8, 32], strides = [1, 1]} : vector<8x128xf32> to vector<8x32xf32>
    %209 = vector.extract_strided_slice %205 {offsets = [0, 96], sizes = [8, 32], strides = [1, 1]} : vector<8x128xf32> to vector<8x32xf32>
    %cst_47 = arith.constant 2.000000e+00 : f32
    %210 = vector.broadcast %cst_47 : f32 to vector<8x32xf32>
    %211 = arith.mulf %210, %209 : vector<8x32xf32>
    %cst_48 = arith.constant 1.000000e+00 : f32
    %212 = vector.broadcast %cst_48 : f32 to vector<8x32xf32>
    %213 = arith.subf %211, %212 : vector<8x32xf32>
    %214 = arith.mulf %207, %170 : vector<8x32xf32>
    %215 = arith.mulf %206, %213 : vector<8x32xf32>
    %216 = arith.addf %214, %215 : vector<8x32xf32>
    %217 = math.tanh %216 : vector<8x32xf32>
    %218 = arith.mulf %208, %217 : vector<8x32xf32>
    %cst_49 = arith.constant dense<0.000000e+00> : vector<8x256xf32>
    %219 = tpu.matmul %218, %0, %cst_49 {dimension_numbers = #tpu.dot_dimension_numbers<[1], [0], [0], [1], [0, 0, 1, 1], [], []>} : vector<8x32xf32>, vector<32x256xf32>, vector<8x256xf32> -> vector<8x256xf32>
    %220 = vector.extract_strided_slice %219 {offsets = [0, 128], sizes = [8, 128], strides = [1, 1]} : vector<8x256xf32> to vector<8x128xf32>
    %221 = vector.broadcast %2 : vector<1x128xf32> to vector<8x128xf32>
    %222 = arith.addf %220, %221 : vector<8x128xf32>
    %223 = arith.addf %222, %196 : vector<8x128xf32>
    %224 = arith.negf %223 : vector<8x128xf32>
    %225 = math.exp %224 : vector<8x128xf32>
    %cst_50 = arith.constant 1.000000e+00 : f32
    %226 = vector.broadcast %cst_50 : f32 to vector<8x128xf32>
    %227 = arith.addf %226, %225 : vector<8x128xf32>
    %228 = arith.divf %226, %227 : vector<8x128xf32>
    %229 = vector.extract_strided_slice %228 {offsets = [0, 0], sizes = [8, 32], strides = [1, 1]} : vector<8x128xf32> to vector<8x32xf32>
    %230 = vector.extract_strided_slice %228 {offsets = [0, 32], sizes = [8, 32], strides = [1, 1]} : vector<8x128xf32> to vector<8x32xf32>
    %231 = vector.extract_strided_slice %228 {offsets = [0, 64], sizes = [8, 32], strides = [1, 1]} : vector<8x128xf32> to vector<8x32xf32>
    %232 = vector.extract_strided_slice %228 {offsets = [0, 96], sizes = [8, 32], strides = [1, 1]} : vector<8x128xf32> to vector<8x32xf32>
    %cst_51 = arith.constant 2.000000e+00 : f32
    %233 = vector.broadcast %cst_51 : f32 to vector<8x32xf32>
    %234 = arith.mulf %233, %232 : vector<8x32xf32>
    %cst_52 = arith.constant 1.000000e+00 : f32
    %235 = vector.broadcast %cst_52 : f32 to vector<8x32xf32>
    %236 = arith.subf %234, %235 : vector<8x32xf32>
    %237 = arith.mulf %230, %193 : vector<8x32xf32>
    %238 = arith.mulf %229, %236 : vector<8x32xf32>
    %239 = arith.addf %237, %238 : vector<8x32xf32>
    %240 = math.tanh %239 : vector<8x32xf32>
    %241 = arith.mulf %231, %240 : vector<8x32xf32>
    %cst_53 = arith.constant dense<0.000000e+00> : vector<8x128xf32>
    %242 = tpu.matmul %241, %1, %cst_53 {dimension_numbers = #tpu.dot_dimension_numbers<[1], [0], [0], [1], [0, 0, 1, 1], [], []>} : vector<8x32xf32>, vector<32x128xf32>, vector<8x128xf32> -> vector<8x128xf32>
    %243 = vector.extract_strided_slice %9 {offsets = [5, 0, 0], sizes = [1, 8, 128], strides = [1, 1, 1]} : vector<8x8x128xf32> to vector<1x8x128xf32>
    %244 = vector.shape_cast %243 : vector<1x8x128xf32> to vector<8x128xf32>
    %245 = vector.extract_strided_slice %219 {offsets = [0, 0], sizes = [8, 128], strides = [1, 1]} : vector<8x256xf32> to vector<8x128xf32>
    %246 = arith.addf %244, %245 : vector<8x128xf32>
    %247 = arith.negf %246 : vector<8x128xf32>
    %248 = math.exp %247 : vector<8x128xf32>
    %cst_54 = arith.constant 1.000000e+00 : f32
    %249 = vector.broadcast %cst_54 : f32 to vector<8x128xf32>
    %250 = arith.addf %249, %248 : vector<8x128xf32>
    %251 = arith.divf %249, %250 : vector<8x128xf32>
    %252 = vector.extract_strided_slice %251 {offsets = [0, 0], sizes = [8, 32], strides = [1, 1]} : vector<8x128xf32> to vector<8x32xf32>
    %253 = vector.extract_strided_slice %251 {offsets = [0, 32], sizes = [8, 32], strides = [1, 1]} : vector<8x128xf32> to vector<8x32xf32>
    %254 = vector.extract_strided_slice %251 {offsets = [0, 64], sizes = [8, 32], strides = [1, 1]} : vector<8x128xf32> to vector<8x32xf32>
    %255 = vector.extract_strided_slice %251 {offsets = [0, 96], sizes = [8, 32], strides = [1, 1]} : vector<8x128xf32> to vector<8x32xf32>
    %cst_55 = arith.constant 2.000000e+00 : f32
    %256 = vector.broadcast %cst_55 : f32 to vector<8x32xf32>
    %257 = arith.mulf %256, %255 : vector<8x32xf32>
    %cst_56 = arith.constant 1.000000e+00 : f32
    %258 = vector.broadcast %cst_56 : f32 to vector<8x32xf32>
    %259 = arith.subf %257, %258 : vector<8x32xf32>
    %260 = arith.mulf %253, %216 : vector<8x32xf32>
    %261 = arith.mulf %252, %259 : vector<8x32xf32>
    %262 = arith.addf %260, %261 : vector<8x32xf32>
    %263 = math.tanh %262 : vector<8x32xf32>
    %264 = arith.mulf %254, %263 : vector<8x32xf32>
    %cst_57 = arith.constant dense<0.000000e+00> : vector<8x256xf32>
    %265 = tpu.matmul %264, %0, %cst_57 {dimension_numbers = #tpu.dot_dimension_numbers<[1], [0], [0], [1], [0, 0, 1, 1], [], []>} : vector<8x32xf32>, vector<32x256xf32>, vector<8x256xf32> -> vector<8x256xf32>
    %266 = vector.extract_strided_slice %265 {offsets = [0, 128], sizes = [8, 128], strides = [1, 1]} : vector<8x256xf32> to vector<8x128xf32>
    %267 = vector.broadcast %2 : vector<1x128xf32> to vector<8x128xf32>
    %268 = arith.addf %266, %267 : vector<8x128xf32>
    %269 = arith.addf %268, %242 : vector<8x128xf32>
    %270 = arith.negf %269 : vector<8x128xf32>
    %271 = math.exp %270 : vector<8x128xf32>
    %cst_58 = arith.constant 1.000000e+00 : f32
    %272 = vector.broadcast %cst_58 : f32 to vector<8x128xf32>
    %273 = arith.addf %272, %271 : vector<8x128xf32>
    %274 = arith.divf %272, %273 : vector<8x128xf32>
    %275 = vector.extract_strided_slice %274 {offsets = [0, 0], sizes = [8, 32], strides = [1, 1]} : vector<8x128xf32> to vector<8x32xf32>
    %276 = vector.extract_strided_slice %274 {offsets = [0, 32], sizes = [8, 32], strides = [1, 1]} : vector<8x128xf32> to vector<8x32xf32>
    %277 = vector.extract_strided_slice %274 {offsets = [0, 64], sizes = [8, 32], strides = [1, 1]} : vector<8x128xf32> to vector<8x32xf32>
    %278 = vector.extract_strided_slice %274 {offsets = [0, 96], sizes = [8, 32], strides = [1, 1]} : vector<8x128xf32> to vector<8x32xf32>
    %cst_59 = arith.constant 2.000000e+00 : f32
    %279 = vector.broadcast %cst_59 : f32 to vector<8x32xf32>
    %280 = arith.mulf %279, %278 : vector<8x32xf32>
    %cst_60 = arith.constant 1.000000e+00 : f32
    %281 = vector.broadcast %cst_60 : f32 to vector<8x32xf32>
    %282 = arith.subf %280, %281 : vector<8x32xf32>
    %283 = arith.mulf %276, %239 : vector<8x32xf32>
    %284 = arith.mulf %275, %282 : vector<8x32xf32>
    %285 = arith.addf %283, %284 : vector<8x32xf32>
    %286 = math.tanh %285 : vector<8x32xf32>
    %287 = arith.mulf %277, %286 : vector<8x32xf32>
    %cst_61 = arith.constant dense<0.000000e+00> : vector<8x128xf32>
    %288 = tpu.matmul %287, %1, %cst_61 {dimension_numbers = #tpu.dot_dimension_numbers<[1], [0], [0], [1], [0, 0, 1, 1], [], []>} : vector<8x32xf32>, vector<32x128xf32>, vector<8x128xf32> -> vector<8x128xf32>
    %289 = vector.extract_strided_slice %9 {offsets = [6, 0, 0], sizes = [1, 8, 128], strides = [1, 1, 1]} : vector<8x8x128xf32> to vector<1x8x128xf32>
    %290 = vector.shape_cast %289 : vector<1x8x128xf32> to vector<8x128xf32>
    %291 = vector.extract_strided_slice %265 {offsets = [0, 0], sizes = [8, 128], strides = [1, 1]} : vector<8x256xf32> to vector<8x128xf32>
    %292 = arith.addf %290, %291 : vector<8x128xf32>
    %293 = arith.negf %292 : vector<8x128xf32>
    %294 = math.exp %293 : vector<8x128xf32>
    %cst_62 = arith.constant 1.000000e+00 : f32
    %295 = vector.broadcast %cst_62 : f32 to vector<8x128xf32>
    %296 = arith.addf %295, %294 : vector<8x128xf32>
    %297 = arith.divf %295, %296 : vector<8x128xf32>
    %298 = vector.extract_strided_slice %297 {offsets = [0, 0], sizes = [8, 32], strides = [1, 1]} : vector<8x128xf32> to vector<8x32xf32>
    %299 = vector.extract_strided_slice %297 {offsets = [0, 32], sizes = [8, 32], strides = [1, 1]} : vector<8x128xf32> to vector<8x32xf32>
    %300 = vector.extract_strided_slice %297 {offsets = [0, 64], sizes = [8, 32], strides = [1, 1]} : vector<8x128xf32> to vector<8x32xf32>
    %301 = vector.extract_strided_slice %297 {offsets = [0, 96], sizes = [8, 32], strides = [1, 1]} : vector<8x128xf32> to vector<8x32xf32>
    %cst_63 = arith.constant 2.000000e+00 : f32
    %302 = vector.broadcast %cst_63 : f32 to vector<8x32xf32>
    %303 = arith.mulf %302, %301 : vector<8x32xf32>
    %cst_64 = arith.constant 1.000000e+00 : f32
    %304 = vector.broadcast %cst_64 : f32 to vector<8x32xf32>
    %305 = arith.subf %303, %304 : vector<8x32xf32>
    %306 = arith.mulf %299, %262 : vector<8x32xf32>
    %307 = arith.mulf %298, %305 : vector<8x32xf32>
    %308 = arith.addf %306, %307 : vector<8x32xf32>
    %309 = math.tanh %308 : vector<8x32xf32>
    %310 = arith.mulf %300, %309 : vector<8x32xf32>
    %cst_65 = arith.constant dense<0.000000e+00> : vector<8x256xf32>
    %311 = tpu.matmul %310, %0, %cst_65 {dimension_numbers = #tpu.dot_dimension_numbers<[1], [0], [0], [1], [0, 0, 1, 1], [], []>} : vector<8x32xf32>, vector<32x256xf32>, vector<8x256xf32> -> vector<8x256xf32>
    %312 = vector.extract_strided_slice %311 {offsets = [0, 128], sizes = [8, 128], strides = [1, 1]} : vector<8x256xf32> to vector<8x128xf32>
    %313 = vector.broadcast %2 : vector<1x128xf32> to vector<8x128xf32>
    %314 = arith.addf %312, %313 : vector<8x128xf32>
    %315 = arith.addf %314, %288 : vector<8x128xf32>
    %316 = arith.negf %315 : vector<8x128xf32>
    %317 = math.exp %316 : vector<8x128xf32>
    %cst_66 = arith.constant 1.000000e+00 : f32
    %318 = vector.broadcast %cst_66 : f32 to vector<8x128xf32>
    %319 = arith.addf %318, %317 : vector<8x128xf32>
    %320 = arith.divf %318, %319 : vector<8x128xf32>
    %321 = vector.extract_strided_slice %320 {offsets = [0, 0], sizes = [8, 32], strides = [1, 1]} : vector<8x128xf32> to vector<8x32xf32>
    %322 = vector.extract_strided_slice %320 {offsets = [0, 32], sizes = [8, 32], strides = [1, 1]} : vector<8x128xf32> to vector<8x32xf32>
    %323 = vector.extract_strided_slice %320 {offsets = [0, 64], sizes = [8, 32], strides = [1, 1]} : vector<8x128xf32> to vector<8x32xf32>
    %324 = vector.extract_strided_slice %320 {offsets = [0, 96], sizes = [8, 32], strides = [1, 1]} : vector<8x128xf32> to vector<8x32xf32>
    %cst_67 = arith.constant 2.000000e+00 : f32
    %325 = vector.broadcast %cst_67 : f32 to vector<8x32xf32>
    %326 = arith.mulf %325, %324 : vector<8x32xf32>
    %cst_68 = arith.constant 1.000000e+00 : f32
    %327 = vector.broadcast %cst_68 : f32 to vector<8x32xf32>
    %328 = arith.subf %326, %327 : vector<8x32xf32>
    %329 = arith.mulf %322, %285 : vector<8x32xf32>
    %330 = arith.mulf %321, %328 : vector<8x32xf32>
    %331 = arith.addf %329, %330 : vector<8x32xf32>
    %332 = math.tanh %331 : vector<8x32xf32>
    %333 = arith.mulf %323, %332 : vector<8x32xf32>
    %cst_69 = arith.constant dense<0.000000e+00> : vector<8x128xf32>
    %334 = tpu.matmul %333, %1, %cst_69 {dimension_numbers = #tpu.dot_dimension_numbers<[1], [0], [0], [1], [0, 0, 1, 1], [], []>} : vector<8x32xf32>, vector<32x128xf32>, vector<8x128xf32> -> vector<8x128xf32>
    %335 = vector.extract_strided_slice %9 {offsets = [7, 0, 0], sizes = [1, 8, 128], strides = [1, 1, 1]} : vector<8x8x128xf32> to vector<1x8x128xf32>
    %336 = vector.shape_cast %335 : vector<1x8x128xf32> to vector<8x128xf32>
    %337 = vector.extract_strided_slice %311 {offsets = [0, 0], sizes = [8, 128], strides = [1, 1]} : vector<8x256xf32> to vector<8x128xf32>
    %338 = arith.addf %336, %337 : vector<8x128xf32>
    %339 = arith.negf %338 : vector<8x128xf32>
    %340 = math.exp %339 : vector<8x128xf32>
    %cst_70 = arith.constant 1.000000e+00 : f32
    %341 = vector.broadcast %cst_70 : f32 to vector<8x128xf32>
    %342 = arith.addf %341, %340 : vector<8x128xf32>
    %343 = arith.divf %341, %342 : vector<8x128xf32>
    %344 = vector.extract_strided_slice %343 {offsets = [0, 0], sizes = [8, 32], strides = [1, 1]} : vector<8x128xf32> to vector<8x32xf32>
    %345 = vector.extract_strided_slice %343 {offsets = [0, 32], sizes = [8, 32], strides = [1, 1]} : vector<8x128xf32> to vector<8x32xf32>
    %346 = vector.extract_strided_slice %343 {offsets = [0, 64], sizes = [8, 32], strides = [1, 1]} : vector<8x128xf32> to vector<8x32xf32>
    %347 = vector.extract_strided_slice %343 {offsets = [0, 96], sizes = [8, 32], strides = [1, 1]} : vector<8x128xf32> to vector<8x32xf32>
    %cst_71 = arith.constant 2.000000e+00 : f32
    %348 = vector.broadcast %cst_71 : f32 to vector<8x32xf32>
    %349 = arith.mulf %348, %347 : vector<8x32xf32>
    %cst_72 = arith.constant 1.000000e+00 : f32
    %350 = vector.broadcast %cst_72 : f32 to vector<8x32xf32>
    %351 = arith.subf %349, %350 : vector<8x32xf32>
    %352 = arith.mulf %345, %308 : vector<8x32xf32>
    %353 = arith.mulf %344, %351 : vector<8x32xf32>
    %354 = arith.addf %352, %353 : vector<8x32xf32>
    %355 = math.tanh %354 : vector<8x32xf32>
    %356 = arith.mulf %346, %355 : vector<8x32xf32>
    %cst_73 = arith.constant dense<0.000000e+00> : vector<8x256xf32>
    %357 = tpu.matmul %356, %0, %cst_73 {dimension_numbers = #tpu.dot_dimension_numbers<[1], [0], [0], [1], [0, 0, 1, 1], [], []>} : vector<8x32xf32>, vector<32x256xf32>, vector<8x256xf32> -> vector<8x256xf32>
    %358 = vector.extract_strided_slice %357 {offsets = [0, 128], sizes = [8, 128], strides = [1, 1]} : vector<8x256xf32> to vector<8x128xf32>
    %359 = vector.broadcast %2 : vector<1x128xf32> to vector<8x128xf32>
    %360 = arith.addf %358, %359 : vector<8x128xf32>
    %361 = arith.addf %360, %334 : vector<8x128xf32>
    %362 = arith.negf %361 : vector<8x128xf32>
    %363 = math.exp %362 : vector<8x128xf32>
    %cst_74 = arith.constant 1.000000e+00 : f32
    %364 = vector.broadcast %cst_74 : f32 to vector<8x128xf32>
    %365 = arith.addf %364, %363 : vector<8x128xf32>
    %366 = arith.divf %364, %365 : vector<8x128xf32>
    %367 = vector.extract_strided_slice %366 {offsets = [0, 0], sizes = [8, 32], strides = [1, 1]} : vector<8x128xf32> to vector<8x32xf32>
    %368 = vector.extract_strided_slice %366 {offsets = [0, 32], sizes = [8, 32], strides = [1, 1]} : vector<8x128xf32> to vector<8x32xf32>
    %369 = vector.extract_strided_slice %366 {offsets = [0, 64], sizes = [8, 32], strides = [1, 1]} : vector<8x128xf32> to vector<8x32xf32>
    %370 = vector.extract_strided_slice %366 {offsets = [0, 96], sizes = [8, 32], strides = [1, 1]} : vector<8x128xf32> to vector<8x32xf32>
    %cst_75 = arith.constant 2.000000e+00 : f32
    %371 = vector.broadcast %cst_75 : f32 to vector<8x32xf32>
    %372 = arith.mulf %371, %370 : vector<8x32xf32>
    %cst_76 = arith.constant 1.000000e+00 : f32
    %373 = vector.broadcast %cst_76 : f32 to vector<8x32xf32>
    %374 = arith.subf %372, %373 : vector<8x32xf32>
    %375 = arith.mulf %368, %331 : vector<8x32xf32>
    %376 = arith.mulf %367, %374 : vector<8x32xf32>
    %377 = arith.addf %375, %376 : vector<8x32xf32>
    %378 = math.tanh %377 : vector<8x32xf32>
    %379 = arith.mulf %369, %378 : vector<8x32xf32>
    %c0_77 = arith.constant 0 : index
    %c0_78 = arith.constant 0 : index
    %380 = vector.load %arg6[%c0_77, %c0_78] : memref<32x128xf32, #tpu.memory_space<vmem>>, vector<32x128xf32>
    %cst_79 = arith.constant dense<0.000000e+00> : vector<8x128xf32>
    %381 = tpu.matmul %379, %380, %cst_79 {dimension_numbers = #tpu.dot_dimension_numbers<[1], [0], [0], [1], [0, 0, 1, 1], [], []>} : vector<8x32xf32>, vector<32x128xf32>, vector<8x128xf32> -> vector<8x128xf32>
    %c0_80 = arith.constant 0 : index
    %c0_81 = arith.constant 0 : index
    %382 = vector.load %arg7[%c0_80, %c0_81] : memref<1x128xf32, #tpu.memory_space<vmem>>, vector<1x128xf32>
    %383 = vector.broadcast %382 : vector<1x128xf32> to vector<8x128xf32>
    %384 = arith.addf %381, %383 : vector<8x128xf32>
    %c0_82 = arith.constant 0 : index
    %c0_83 = arith.constant 0 : index
    %385 = vector.load %arg8[%c0_82, %c0_83] : memref<8x128xf32, #tpu.memory_space<vmem>>, vector<8x128xf32>
    tpu.vector_store %arg8[%c0_82, %c0_83], %384 {strides = array<i32>} : memref<8x128xf32, #tpu.memory_space<vmem>>, vector<8x128xf32>,
    return
  }
}

</mosaic_0001>

<llo_original>
// kernel: tpu_custom_call.1
$region0: #{tpu_custom_call.1}
  #allocation0 [shape = 'u32[]', space=smem, size = 0x4, offset = 0x4, fixed_abs, tag = 'smem constant byte address 0x4 - core index']
  #allocation1 [shape = 'u32[144,128]{1,0:T(1,128)}', space=vmem, size = 0x12000, scoped, tag = 'internal scratch']
  %s0 = inlined_call_operand.vmem [shape: f32[64,8], index: 0, kind: input, shape index: {}]
  %s1 = inlined_call_operand.vmem [shape: f32[8,128], index: 1, kind: input, shape index: {}]
  %s2 = inlined_call_operand.vmem [shape: f32[1,128], index: 2, kind: input, shape index: {}]
  %s3 = inlined_call_operand.vmem [shape: f32[32,256], index: 3, kind: input, shape index: {}]
  %s4 = inlined_call_operand.hbm [shape: f32[32,128], index: 4, kind: input, shape index: {}]
  %s5 = inlined_call_operand.vmem [shape: f32[1,128], index: 5, kind: input, shape index: {}]
  %s6 = inlined_call_operand.hbm [shape: f32[32,128], index: 6, kind: input, shape index: {}]
  %s7 = inlined_call_operand.vmem [shape: f32[1,128], index: 7, kind: input, shape index: {}]
  %s8 = inlined_call_operand.hbm [shape: f32[8,128], index: 8, kind: output, shape index: {}]
  %s9 = sld [smem:[#allocation0]]
  $region50: #{tpu_custom_call.1} parent=0
    _
  %s11 = ssub.s32 1, %s9
  %s12 = scalar_select 0, %s11, %s9
  $region1: #{tpu_custom_call.1} parent=0
    #allocation2 [shape = 'u8[16384]{0}', space=vmem, size = 0x4000, scoped, tag = 'input window, operand 4, single buffered']
    #allocation3 [shape = 's32[1]{0}', space=sflag, size = 0x4, scoped, tag = 'scoped memory for tpu_custom_call.1']
    #allocation4 [shape = 's32[1]{0}', space=sflag, size = 0x4, scoped, tag = 'scoped memory for tpu_custom_call.1']
    #allocation5 [shape = 'u8[16384]{0}', space=vmem, size = 0x4000, scoped, tag = 'input window, operand 6, single buffered']
    #allocation6 [shape = 's32[1]{0}', space=sflag, size = 0x4, scoped, tag = 'scoped memory for tpu_custom_call.1']
    #allocation7 [shape = 'u8[4096]{0}', space=vmem, size = 0x1000, scoped, tag = 'output window, operand 0, single buffered']
    %13 = vsyncpa [#allocation3], 0
    %14 = vsyncpa [#allocation6], 0
    %15 = vsyncpa [#allocation4], 0
    // Predicated region
    $region2: #{tpu_custom_call.1} parent=1 // pred_check
      _
    $region3: #{tpu_custom_call.1} parent=1 // pred_check_branch
      %17 = sbr.rel (0) target = $region5
    $region4: #{tpu_custom_call.1} parent=1 // pred_region
      _
    $region5: #{tpu_custom_call.1} parent=1 // pred_fallthru
      _
    // Predicated region
    $region6: #{tpu_custom_call.1} parent=1 // pred_check
      _
    $region7: #{tpu_custom_call.1} parent=1 // pred_check_branch
      %19 = sbr.rel (0) target = $region9
    $region8: #{tpu_custom_call.1} parent=1 // pred_region
      _
    $region9: #{tpu_custom_call.1} parent=1 // pred_fallthru
      _
    // Predicated region
    $region10: #{tpu_custom_call.1} parent=1 // pred_check
      _
    $region11: #{tpu_custom_call.1} parent=1 // pred_check_branch
      %21 = sbr.rel (0) target = $region13
    $region12: #{tpu_custom_call.1} parent=1 // pred_region
      _
    $region13: #{tpu_custom_call.1} parent=1 // pred_fallthru
      _
    // Predicated region
    $region14: #{tpu_custom_call.1} parent=1 // pred_check
      _
    $region15: #{tpu_custom_call.1} parent=1 // pred_check_branch
      %23 = sbr.rel (0) target = $region17
    $region16: #{tpu_custom_call.1} parent=1 // pred_region
      _
    $region17: #{tpu_custom_call.1} parent=1 // pred_fallthru
      _
    // Predicated region
    $region18: #{tpu_custom_call.1} parent=1 // pred_check
      _
    $region19: #{tpu_custom_call.1} parent=1 // pred_check_branch
      %25 = sbr.rel (0) target = $region21
    $region20: #{tpu_custom_call.1} parent=1 // pred_region
      %s27 = ssub.s32 512, 512
      %28 = vsyncadd [#allocation3], %s27
      %s29 = sshll.u32 [#allocation2], 4
      %s30 = int_to_ptr.vmem [resolvable:$true] %s29
      %35 = dma.hbm_to_vmem [thread:$0]  %s4, 512, %s30, [#allocation3], 128, 128, 8
    $region21: #{tpu_custom_call.1} parent=1 // pred_fallthru
      _
    // Predicated region
    $region22: #{tpu_custom_call.1} parent=1 // pred_check
      _
    $region23: #{tpu_custom_call.1} parent=1 // pred_check_branch
      %37 = sbr.rel (0) target = $region25
    $region24: #{tpu_custom_call.1} parent=1 // pred_region
      _
    $region25: #{tpu_custom_call.1} parent=1 // pred_fallthru
      _
    // Predicated region
    $region26: #{tpu_custom_call.1} parent=1 // pred_check
      _
    $region27: #{tpu_custom_call.1} parent=1 // pred_check_branch
      %39 = sbr.rel (0) target = $region29
    $region28: #{tpu_custom_call.1} parent=1 // pred_region
      %s41 = ssub.s32 512, 512
      %42 = vsyncadd [#allocation6], %s41
      %s43 = sshll.u32 [#allocation5], 4
      %s44 = int_to_ptr.vmem [resolvable:$true] %s43
      %49 = dma.hbm_to_vmem [thread:$0]  %s6, 512, %s44, [#allocation6], 128, 128, 8
    $region29: #{tpu_custom_call.1} parent=1 // pred_fallthru
      _
    // Predicated region
    $region30: #{tpu_custom_call.1} parent=1 // pred_check
      _
    $region31: #{tpu_custom_call.1} parent=1 // pred_check_branch
      %51 = sbr.rel (0) target = $region33
    $region32: #{tpu_custom_call.1} parent=1 // pred_region
      _
    $region33: #{tpu_custom_call.1} parent=1 // pred_fallthru
      _
    // Predicated region
    $region34: #{tpu_custom_call.1} parent=1 // pred_check
      _
    $region35: #{tpu_custom_call.1} parent=1 // pred_check_branch
      %53 = sbr.rel (0) target = $region37
    $region36: #{tpu_custom_call.1} parent=1 // pred_region
      %54 = dma.done [#allocation3], 512
    $region37: #{tpu_custom_call.1} parent=1 // pred_fallthru
      _
    // Predicated region
    $region38: #{tpu_custom_call.1} parent=1 // pred_check
      _
    $region39: #{tpu_custom_call.1} parent=1 // pred_check_branch
      %56 = sbr.rel (0) target = $region41
    $region40: #{tpu_custom_call.1} parent=1 // pred_region
      %57 = dma.done [#allocation6], 512
    $region41: #{tpu_custom_call.1} parent=1 // pred_fallthru
      _
    %v58 = vld [vmem:[%s3] sm:$0xff]
    %v59 = vld [vmem:[%s3 + $0x8] sm:$0xff]
    %v60 = vld [vmem:[%s3 + $0x10] sm:$0xff]
    %v61 = vld [vmem:[%s3 + $0x18] sm:$0xff]
    %v62 = vld [vmem:[%s3 + $0x20] sm:$0xff]
    %v63 = vld [vmem:[%s3 + $0x28] sm:$0xff]
    %v64 = vld [vmem:[%s3 + $0x30] sm:$0xff]
    %v65 = vld [vmem:[%s3 + $0x38] sm:$0xff]
    %v66 = vld [vmem:[#allocation2] sm:$0xff]
    %v67 = vld [vmem:[#allocation2 + $0x8] sm:$0xff]
    %v68 = vld [vmem:[#allocation2 + $0x10] sm:$0xff]
    %v69 = vld [vmem:[#allocation2 + $0x18] sm:$0xff]
    %v70 = vld [vmem:[%s5] sm:$0x1]
    %v71 = vld [vmem:[%s0] sm:$0xff]
    %v72 = vld [vmem:[%s0 + $0x8] sm:$0xff]
    %v73 = vld [vmem:[%s0 + $0x10] sm:$0xff]
    %v74 = vld [vmem:[%s0 + $0x18] sm:$0xff]
    %v75 = vld [vmem:[%s0 + $0x20] sm:$0xff]
    %v76 = vld [vmem:[%s0 + $0x28] sm:$0xff]
    %v77 = vld [vmem:[%s0 + $0x30] sm:$0xff]
    %v78 = vld [vmem:[%s0 + $0x38] sm:$0xff]
    %v79 = vld [vmem:[%s1] sm:$0xff]
    %v80 = vld [vmem:[%s2] sm:$0x1]
    %v82 = vlaneseq
    %v83 = vshrl.u32 %v82, 7
    %v84 = vsub.s32 0, %v83
    %v85 = vrot.slane %v80, %v84
    %vm87 = vcmask 64512
    %v89 = vsel %vm87, %v71, 0
    %v92 = vsel %vm87, %v72, 0
    %v95 = vsel %vm87, %v73, 0
    %v98 = vsel %vm87, %v74, 0
    %v101 = vsel %vm87, %v75, 0
    %v104 = vsel %vm87, %v76, 0
    %v107 = vsel %vm87, %v77, 0
    %v110 = vsel %vm87, %v78, 0
    %112 = vmatprep.subr.mxu0 0.0
    %113 = vmatpush1.msra.mxu0 %v79
    %114 = vmatprep.subr.mxu0 0.0
    %115 = vmatpush1.msra.mxu0 0.0
    %116 = vmatprep.subr.mxu0 0.0
    %117 = vmatpush1.msra.mxu0 0.0
    %118 = vmatprep.subr.mxu0 0.0
    %119 = vmatpush1.msra.mxu0 0.0
    %120 = vmatprep.subr.mxu0 0.0
    %121 = vmatpush1.msra.mxu0 0.0
    %122 = vmatprep.subr.mxu0 0.0
    %123 = vmatpush1.msra.mxu0 0.0
    %124 = vmatprep.subr.mxu0 0.0
    %125 = vmatpush1.msra.mxu0 0.0
    %126 = vmatprep.subr.mxu0 0.0
    %127 = vmatpush1.msra.mxu0 0.0
    %128 = vmatprep.subr.mxu0 0.0
    %129 = vmatpush1.msra.mxu0 0.0
    %130 = vmatprep.subr.mxu0 0.0
    %131 = vmatpush1.msra.mxu0 0.0
    %132 = vmatprep.subr.mxu0 0.0
    %133 = vmatpush1.msra.mxu0 0.0
    %134 = vmatprep.subr.mxu0 0.0
    %135 = vmatpush1.msra.mxu0 0.0
    %136 = vmatprep.subr.mxu0 0.0
    %137 = vmatpush1.msra.mxu0 0.0
    %138 = vmatprep.subr.mxu0 0.0
    %139 = vmatpush1.msra.mxu0 0.0
    %140 = vmatprep.subr.mxu0 0.0
    %141 = vmatpush1.msra.mxu0 0.0
    %142 = vmatprep.subr.mxu0 0.0
    %143 = vmatpush1.msra.mxu0 0.0
    %144 = vmatprep.subr.mxu0 0.0
    %145 = vmatpush1.msra.mxu0 0.0
    %146 = vmatprep.subr.mxu0 0.0
    %147 = vmatpush1.msra.mxu0 0.0
    %148 = vmatprep.subr.mxu0 0.0
    %149 = vmatpush1.msra.mxu0 0.0
    %150 = vmatprep.subr.mxu0 0.0
    %151 = vmatpush1.msra.mxu0 0.0
    %152 = vmatprep.subr.mxu0 0.0
    %153 = vmatpush1.msra.mxu0 0.0
    %154 = vmatprep.subr.mxu0 0.0
    %155 = vmatpush1.msra.mxu0 0.0
    %156 = vmatprep.subr.mxu0 0.0
    %157 = vmatpush1.msra.mxu0 0.0
    %158 = vmatprep.subr.mxu0 0.0
    %159 = vmatpush1.msra.mxu0 0.0
    %160 = vmatprep.subr.mxu0 0.0
    %161 = vmatpush1.msra.mxu0 0.0
    %162 = vmatprep.subr.mxu0 0.0
    %163 = vmatpush1.msra.mxu0 0.0
    %164 = vmatprep.subr.mxu0 0.0
    %165 = vmatpush1.msra.mxu0 0.0
    %166 = vmatprep.subr.mxu0 0.0
    %167 = vmatpush1.msra.mxu0 0.0
    %168 = vmatprep.subr.mxu0 0.0
    %169 = vmatpush1.msra.mxu0 0.0
    %170 = vmatprep.subr.mxu0 0.0
    %171 = vmatpush1.msra.mxu0 0.0
    %172 = vmatprep.subr.mxu0 0.0
    %173 = vmatpush1.msra.mxu0 0.0
    %174 = vmatprep.subr.mxu0 0.0
    %175 = vmatpush1.msra.mxu0 0.0
    %176 = vmatprep.mubr.f32.mxu0 0.0
    %177 = vmatmul.mubr.f32.gmra.mrb[0].mxu0 %v89
    %v178 = vpop.f32.mrb[0].mxu0
    %v179 = vadd.f32 %v85, %v178
    %v180 = vpop.f32.mrb[0].mxu0
    %181 = vmatprep.mubr.f32.mxu0 0.0
    %182 = vmatmul.mubr.f32.gmra.mrb[0].mxu0 %v92
    %v183 = vpop.f32.mrb[0].mxu0
    %v184 = vadd.f32 %v85, %v183
    %v185 = vpop.f32.mrb[0].mxu0
    %186 = vmatprep.mubr.f32.mxu0 0.0
    %187 = vmatmul.mubr.f32.gmra.mrb[0].mxu0 %v95
    %v188 = vpop.f32.mrb[0].mxu0
    %v189 = vadd.f32 %v85, %v188
    %v190 = vpop.f32.mrb[0].mxu0
    %191 = vmatprep.mubr.f32.mxu0 0.0
    %192 = vmatmul.mubr.f32.gmra.mrb[0].mxu0 %v98
    %v193 = vpop.f32.mrb[0].mxu0
    %v194 = vadd.f32 %v85, %v193
    %v195 = vpop.f32.mrb[0].mxu0
    %196 = vmatprep.mubr.f32.mxu0 0.0
    %197 = vmatmul.mubr.f32.gmra.mrb[0].mxu0 %v101
    %v198 = vpop.f32.mrb[0].mxu0
    %v199 = vadd.f32 %v85, %v198
    %v200 = vpop.f32.mrb[0].mxu0
    %201 = vmatprep.mubr.f32.mxu0 0.0
    %202 = vmatmul.mubr.f32.gmra.mrb[0].mxu0 %v104
    %v203 = vpop.f32.mrb[0].mxu0
    %v204 = vadd.f32 %v85, %v203
    %v205 = vpop.f32.mrb[0].mxu0
    %206 = vmatprep.mubr.f32.mxu0 0.0
    %207 = vmatmul.mubr.f32.gmra.mrb[0].mxu0 %v107
    %v208 = vpop.f32.mrb[0].mxu0
    %v209 = vadd.f32 %v85, %v208
    %v210 = vpop.f32.mrb[0].mxu0
    %211 = vmatprep.mubr.f32.mxu0 0.0
    %212 = vmatmul.mubr.f32.gmra.mrb[0].mxu0 %v110
    %v213 = vpop.f32.mrb[0].mxu0
    %v214 = vadd.f32 %v85, %v213
    %v215 = vpop.f32.mrb[0].mxu0
    %216 = vdwg.mxu0
    %v217 = vadd.f32 %v179, 0.0
    %v218 = vxor.u32 %v217, 2147483648
    %v219 = vmul.f32 %v218, 1.442695
    %v220 = vpow.pop %v219
    %v221 = vadd.f32 %v220, 1.0
    %v222 = vrcp.pop %v221
    %v223 = vmul.f32 1.0, %v222
    %v224 = vmul.f32 %v223, 2.0
    %v225 = vsub.f32 %v224, 1.0
    %v226 = vmul.f32 %v223, 0.0
    %228 = vrot.lane.b32.xlu0 %v225, 32
    %v229 = vpop.permute.xlu0 %228
    %v231 = vmul.f32 %v223, %v229
    %233 = vrot.lane.b32.xlu0 %v231, 32
    %v234 = vpop.permute.xlu0 %233
    %v236 = vadd.f32 %v226, %v234
    %v237 = vtanh.pop %v236
    %239 = vrot.lane.b32.xlu0 %v237, 32
    %v240 = vpop.permute.xlu0 %239
    %v242 = vmul.f32 %v223, %v240
    %244 = vrot.lane.b32.xlu0 %v242, 64
    %v245 = vpop.permute.xlu0 %244
    %vm246 = vcmask 261120
    %v247 = vsel %vm246, %v245, 0
    %249 = vmatprep.subr.mxu0 %v59
    %250 = vmatpush1.msra.mxu0 %v58
    %251 = vmatprep.subr.mxu0 %v61
    %252 = vmatpush1.msra.mxu0 %v60
    %253 = vmatprep.subr.mxu0 %v63
    %254 = vmatpush1.msra.mxu0 %v62
    %255 = vmatprep.subr.mxu0 %v65
    %256 = vmatpush1.msra.mxu0 %v64
    %257 = vmatprep.subr.mxu0 0.0
    %258 = vmatpush1.msra.mxu0 0.0
    %259 = vmatprep.subr.mxu0 0.0
    %260 = vmatpush1.msra.mxu0 0.0
    %261 = vmatprep.subr.mxu0 0.0
    %262 = vmatpush1.msra.mxu0 0.0
    %263 = vmatprep.subr.mxu0 0.0
    %264 = vmatpush1.msra.mxu0 0.0
    %265 = vmatprep.subr.mxu0 0.0
    %266 = vmatpush1.msra.mxu0 0.0
    %267 = vmatprep.subr.mxu0 0.0
    %268 = vmatpush1.msra.mxu0 0.0
    %269 = vmatprep.subr.mxu0 0.0
    %270 = vmatpush1.msra.mxu0 0.0
    %271 = vmatprep.subr.mxu0 0.0
    %272 = vmatpush1.msra.mxu0 0.0
    %273 = vmatprep.subr.mxu0 0.0
    %274 = vmatpush1.msra.mxu0 0.0
    %275 = vmatprep.subr.mxu0 0.0
    %276 = vmatpush1.msra.mxu0 0.0
    %277 = vmatprep.subr.mxu0 0.0
    %278 = vmatpush1.msra.mxu0 0.0
    %279 = vmatprep.subr.mxu0 0.0
    %280 = vmatpush1.msra.mxu0 0.0
    %281 = vmatprep.subr.mxu0 0.0
    %282 = vmatpush1.msra.mxu0 0.0
    %283 = vmatprep.subr.mxu0 0.0
    %284 = vmatpush1.msra.mxu0 0.0
    %285 = vmatprep.subr.mxu0 0.0
    %286 = vmatpush1.msra.mxu0 0.0
    %287 = vmatprep.subr.mxu0 0.0
    %288 = vmatpush1.msra.mxu0 0.0
    %289 = vmatprep.subr.mxu0 0.0
    %290 = vmatpush1.msra.mxu0 0.0
    %291 = vmatprep.subr.mxu0 0.0
    %292 = vmatpush1.msra.mxu0 0.0
    %293 = vmatprep.subr.mxu0 0.0
    %294 = vmatpush1.msra.mxu0 0.0
    %295 = vmatprep.subr.mxu0 0.0
    %296 = vmatpush1.msra.mxu0 0.0
    %297 = vmatprep.subr.mxu0 0.0
    %298 = vmatpush1.msra.mxu0 0.0
    %299 = vmatprep.subr.mxu0 0.0
    %300 = vmatpush1.msra.mxu0 0.0
    %301 = vmatprep.subr.mxu0 0.0
    %302 = vmatpush1.msra.mxu0 0.0
    %303 = vmatprep.subr.mxu0 0.0
    %304 = vmatpush1.msra.mxu0 0.0
    %305 = vmatprep.subr.mxu0 0.0
    %306 = vmatpush1.msra.mxu0 0.0
    %307 = vmatprep.subr.mxu0 0.0
    %308 = vmatpush1.msra.mxu0 0.0
    %309 = vmatprep.subr.mxu0 0.0
    %310 = vmatpush1.msra.mxu0 0.0
    %311 = vmatprep.subr.mxu0 0.0
    %312 = vmatpush1.msra.mxu0 0.0
    %313 = vmatprep.mubr.f32.mxu0 0.0
    %314 = vmatmul.mubr.f32.gmra.mrb[0].mxu0 %v247
    %v315 = vpop.f32.mrb[0].mxu0
    %v316 = vadd.f32 0.0, %v315
    %v317 = vpop.f32.mrb[0].mxu0
    %v318 = vadd.f32 0.0, %v317
    %319 = vdwg.mxu0
    %v321 = vlaneseq
    %v322 = vshrl.u32 %v321, 7
    %v323 = vsub.s32 0, %v322
    %v324 = vrot.slane %v70, %v323
    %v326 = vadd.f32 %v318, %v324
    %v327 = vadd.f32 %v326, 0.0
    %v328 = vxor.u32 %v327, 2147483648
    %v329 = vmul.f32 %v328, 1.442695
    %v330 = vpow.pop %v329
    %v331 = vadd.f32 %v330, 1.0
    %v332 = vrcp.pop %v331
    %v333 = vmul.f32 1.0, %v332
    %v334 = vmul.f32 %v333, 2.0
    %v335 = vsub.f32 %v334, 1.0
    %v336 = vmul.f32 %v333, 0.0
    %338 = vrot.lane.b32.xlu0 %v335, 32
    %v339 = vpop.permute.xlu0 %338
    %v341 = vmul.f32 %v333, %v339
    %343 = vrot.lane.b32.xlu0 %v341, 32
    %v344 = vpop.permute.xlu0 %343
    %v346 = vadd.f32 %v336, %v344
    %v347 = vtanh.pop %v346
    %349 = vrot.lane.b32.xlu0 %v347, 32
    %v350 = vpop.permute.xlu0 %349
    %v352 = vmul.f32 %v333, %v350
    %354 = vrot.lane.b32.xlu0 %v352, 64
    %v355 = vpop.permute.xlu0 %354
    %v356 = vsel %vm246, %v355, 0
    %358 = vmatprep.subr.mxu0 0.0
    %359 = vmatpush1.msra.mxu0 %v66
    %360 = vmatprep.subr.mxu0 0.0
    %361 = vmatpush1.msra.mxu0 %v67
    %362 = vmatprep.subr.mxu0 0.0
    %363 = vmatpush1.msra.mxu0 %v68
    %364 = vmatprep.subr.mxu0 0.0
    %365 = vmatpush1.msra.mxu0 %v69
    %366 = vmatprep.subr.mxu0 0.0
    %367 = vmatpush1.msra.mxu0 0.0
    %368 = vmatprep.subr.mxu0 0.0
    %369 = vmatpush1.msra.mxu0 0.0
    %370 = vmatprep.subr.mxu0 0.0
    %371 = vmatpush1.msra.mxu0 0.0
    %372 = vmatprep.subr.mxu0 0.0
    %373 = vmatpush1.msra.mxu0 0.0
    %374 = vmatprep.subr.mxu0 0.0
    %375 = vmatpush1.msra.mxu0 0.0
    %376 = vmatprep.subr.mxu0 0.0
    %377 = vmatpush1.msra.mxu0 0.0
    %378 = vmatprep.subr.mxu0 0.0
    %379 = vmatpush1.msra.mxu0 0.0
    %380 = vmatprep.subr.mxu0 0.0
    %381 = vmatpush1.msra.mxu0 0.0
    %382 = vmatprep.subr.mxu0 0.0
    %383 = vmatpush1.msra.mxu0 0.0
    %384 = vmatprep.subr.mxu0 0.0
    %385 = vmatpush1.msra.mxu0 0.0
    %386 = vmatprep.subr.mxu0 0.0
    %387 = vmatpush1.msra.mxu0 0.0
    %388 = vmatprep.subr.mxu0 0.0
    %389 = vmatpush1.msra.mxu0 0.0
    %390 = vmatprep.subr.mxu0 0.0
    %391 = vmatpush1.msra.mxu0 0.0
    %392 = vmatprep.subr.mxu0 0.0
    %393 = vmatpush1.msra.mxu0 0.0
    %394 = vmatprep.subr.mxu0 0.0
    %395 = vmatpush1.msra.mxu0 0.0
    %396 = vmatprep.subr.mxu0 0.0
    %397 = vmatpush1.msra.mxu0 0.0
    %398 = vmatprep.subr.mxu0 0.0
    %399 = vmatpush1.msra.mxu0 0.0
    %400 = vmatprep.subr.mxu0 0.0
    %401 = vmatpush1.msra.mxu0 0.0
    %402 = vmatprep.subr.mxu0 0.0
    %403 = vmatpush1.msra.mxu0 0.0
    %404 = vmatprep.subr.mxu0 0.0
    %405 = vmatpush1.msra.mxu0 0.0
    %406 = vmatprep.subr.mxu0 0.0
    %407 = vmatpush1.msra.mxu0 0.0
    %408 = vmatprep.subr.mxu0 0.0
    %409 = vmatpush1.msra.mxu0 0.0
    %410 = vmatprep.subr.mxu0 0.0
    %411 = vmatpush1.msra.mxu0 0.0
    %412 = vmatprep.subr.mxu0 0.0
    %413 = vmatpush1.msra.mxu0 0.0
    %414 = vmatprep.subr.mxu0 0.0
    %415 = vmatpush1.msra.mxu0 0.0
    %416 = vmatprep.subr.mxu0 0.0
    %417 = vmatpush1.msra.mxu0 0.0
    %418 = vmatprep.subr.mxu0 0.0
    %419 = vmatpush1.msra.mxu0 0.0
    %420 = vmatprep.subr.mxu0 0.0
    %421 = vmatpush1.msra.mxu0 0.0
    %422 = vmatprep.mubr.f32.mxu0 0.0
    %423 = vmatmul.mubr.f32.gmra.mrb[0].mxu0 %v356
    %v424 = vpop.f32.mrb[0].mxu0
    %v425 = vadd.f32 0.0, %v424
    %v426 = vpop.f32.mrb[0].mxu0
    %427 = vdwg.mxu0
    %v428 = vadd.f32 %v184, %v316
    %v429 = vxor.u32 %v428, 2147483648
    %v430 = vmul.f32 %v429, 1.442695
    %v431 = vpow.pop %v430
    %v432 = vadd.f32 %v431, 1.0
    %v433 = vrcp.pop %v432
    %v434 = vmul.f32 1.0, %v433
    %v435 = vmul.f32 %v434, 2.0
    %v436 = vsub.f32 %v435, 1.0
    %v437 = vmul.f32 %v434, %v236
    %439 = vrot.lane.b32.xlu0 %v436, 32
    %v440 = vpop.permute.xlu0 %439
    %v442 = vmul.f32 %v434, %v440
    %444 = vrot.lane.b32.xlu0 %v442, 32
    %v445 = vpop.permute.xlu0 %444
    %v447 = vadd.f32 %v437, %v445
    %v448 = vtanh.pop %v447
    %450 = vrot.lane.b32.xlu0 %v448, 32
    %v451 = vpop.permute.xlu0 %450
    %v453 = vmul.f32 %v434, %v451
    %455 = vrot.lane.b32.xlu0 %v453, 64
    %v456 = vpop.permute.xlu0 %455
    %v457 = vsel %vm246, %v456, 0
    %459 = vmatprep.subr.mxu0 %v59
    %460 = vmatpush1.msra.mxu0 %v58
    %461 = vmatprep.subr.mxu0 %v61
    %462 = vmatpush1.msra.mxu0 %v60
    %463 = vmatprep.subr.mxu0 %v63
    %464 = vmatpush1.msra.mxu0 %v62
    %465 = vmatprep.subr.mxu0 %v65
    %466 = vmatpush1.msra.mxu0 %v64
    %467 = vmatprep.subr.mxu0 0.0
    %468 = vmatpush1.msra.mxu0 0.0
    %469 = vmatprep.subr.mxu0 0.0
    %470 = vmatpush1.msra.mxu0 0.0
    %471 = vmatprep.subr.mxu0 0.0
    %472 = vmatpush1.msra.mxu0 0.0
    %473 = vmatprep.subr.mxu0 0.0
    %474 = vmatpush1.msra.mxu0 0.0
    %475 = vmatprep.subr.mxu0 0.0
    %476 = vmatpush1.msra.mxu0 0.0
    %477 = vmatprep.subr.mxu0 0.0
    %478 = vmatpush1.msra.mxu0 0.0
    %479 = vmatprep.subr.mxu0 0.0
    %480 = vmatpush1.msra.mxu0 0.0
    %481 = vmatprep.subr.mxu0 0.0
    %482 = vmatpush1.msra.mxu0 0.0
    %483 = vmatprep.subr.mxu0 0.0
    %484 = vmatpush1.msra.mxu0 0.0
    %485 = vmatprep.subr.mxu0 0.0
    %486 = vmatpush1.msra.mxu0 0.0
    %487 = vmatprep.subr.mxu0 0.0
    %488 = vmatpush1.msra.mxu0 0.0
    %489 = vmatprep.subr.mxu0 0.0
    %490 = vmatpush1.msra.mxu0 0.0
    %491 = vmatprep.subr.mxu0 0.0
    %492 = vmatpush1.msra.mxu0 0.0
    %493 = vmatprep.subr.mxu0 0.0
    %494 = vmatpush1.msra.mxu0 0.0
    %495 = vmatprep.subr.mxu0 0.0
    %496 = vmatpush1.msra.mxu0 0.0
    %497 = vmatprep.subr.mxu0 0.0
    %498 = vmatpush1.msra.mxu0 0.0
    %499 = vmatprep.subr.mxu0 0.0
    %500 = vmatpush1.msra.mxu0 0.0
    %501 = vmatprep.subr.mxu0 0.0
    %502 = vmatpush1.msra.mxu0 0.0
    %503 = vmatprep.subr.mxu0 0.0
    %504 = vmatpush1.msra.mxu0 0.0
    %505 = vmatprep.subr.mxu0 0.0
    %506 = vmatpush1.msra.mxu0 0.0
    %507 = vmatprep.subr.mxu0 0.0
    %508 = vmatpush1.msra.mxu0 0.0
    %509 = vmatprep.subr.mxu0 0.0
    %510 = vmatpush1.msra.mxu0 0.0
    %511 = vmatprep.subr.mxu0 0.0
    %512 = vmatpush1.msra.mxu0 0.0
    %513 = vmatprep.subr.mxu0 0.0
    %514 = vmatpush1.msra.mxu0 0.0
    %515 = vmatprep.subr.mxu0 0.0
    %516 = vmatpush1.msra.mxu0 0.0
    %517 = vmatprep.subr.mxu0 0.0
    %518 = vmatpush1.msra.mxu0 0.0
    %519 = vmatprep.subr.mxu0 0.0
    %520 = vmatpush1.msra.mxu0 0.0
    %521 = vmatprep.subr.mxu0 0.0
    %522 = vmatpush1.msra.mxu0 0.0
    %523 = vmatprep.mubr.f32.mxu0 0.0
    %524 = vmatmul.mubr.f32.gmra.mrb[0].mxu0 %v457
    %v525 = vpop.f32.mrb[0].mxu0
    %v526 = vadd.f32 0.0, %v525
    %v527 = vpop.f32.mrb[0].mxu0
    %v528 = vadd.f32 0.0, %v527
    %529 = vdwg.mxu0
    %v530 = vadd.f32 %v528, %v324
    %v531 = vadd.f32 %v530, %v425
    %v532 = vxor.u32 %v531, 2147483648
    %v533 = vmul.f32 %v532, 1.442695
    %v534 = vpow.pop %v533
    %v535 = vadd.f32 %v534, 1.0
    %v536 = vrcp.pop %v535
    %v537 = vmul.f32 1.0, %v536
    %v538 = vmul.f32 %v537, 2.0
    %v539 = vsub.f32 %v538, 1.0
    %v540 = vmul.f32 %v537, %v346
    %542 = vrot.lane.b32.xlu0 %v539, 32
    %v543 = vpop.permute.xlu0 %542
    %v545 = vmul.f32 %v537, %v543
    %547 = vrot.lane.b32.xlu0 %v545, 32
    %v548 = vpop.permute.xlu0 %547
    %v550 = vadd.f32 %v540, %v548
    %v551 = vtanh.pop %v550
    %553 = vrot.lane.b32.xlu0 %v551, 32
    %v554 = vpop.permute.xlu0 %553
    %v556 = vmul.f32 %v537, %v554
    %558 = vrot.lane.b32.xlu0 %v556, 64
    %v559 = vpop.permute.xlu0 %558
    %v560 = vsel %vm246, %v559, 0
    %562 = vmatprep.subr.mxu0 0.0
    %563 = vmatpush1.msra.mxu0 %v66
    %564 = vmatprep.subr.mxu0 0.0
    %565 = vmatpush1.msra.mxu0 %v67
    %566 = vmatprep.subr.mxu0 0.0
    %567 = vmatpush1.msra.mxu0 %v68
    %568 = vmatprep.subr.mxu0 0.0
    %569 = vmatpush1.msra.mxu0 %v69
    %570 = vmatprep.subr.mxu0 0.0
    %571 = vmatpush1.msra.mxu0 0.0
    %572 = vmatprep.subr.mxu0 0.0
    %573 = vmatpush1.msra.mxu0 0.0
    %574 = vmatprep.subr.mxu0 0.0
    %575 = vmatpush1.msra.mxu0 0.0
    %576 = vmatprep.subr.mxu0 0.0
    %577 = vmatpush1.msra.mxu0 0.0
    %578 = vmatprep.subr.mxu0 0.0
    %579 = vmatpush1.msra.mxu0 0.0
    %580 = vmatprep.subr.mxu0 0.0
    %581 = vmatpush1.msra.mxu0 0.0
    %582 = vmatprep.subr.mxu0 0.0
    %583 = vmatpush1.msra.mxu0 0.0
    %584 = vmatprep.subr.mxu0 0.0
    %585 = vmatpush1.msra.mxu0 0.0
    %586 = vmatprep.subr.mxu0 0.0
    %587 = vmatpush1.msra.mxu0 0.0
    %588 = vmatprep.subr.mxu0 0.0
    %589 = vmatpush1.msra.mxu0 0.0
    %590 = vmatprep.subr.mxu0 0.0
    %591 = vmatpush1.msra.mxu0 0.0
    %592 = vmatprep.subr.mxu0 0.0
    %593 = vmatpush1.msra.mxu0 0.0
    %594 = vmatprep.subr.mxu0 0.0
    %595 = vmatpush1.msra.mxu0 0.0
    %596 = vmatprep.subr.mxu0 0.0
    %597 = vmatpush1.msra.mxu0 0.0
    %598 = vmatprep.subr.mxu0 0.0
    %599 = vmatpush1.msra.mxu0 0.0
    %600 = vmatprep.subr.mxu0 0.0
    %601 = vmatpush1.msra.mxu0 0.0
    %602 = vmatprep.subr.mxu0 0.0
    %603 = vmatpush1.msra.mxu0 0.0
    %604 = vmatprep.subr.mxu0 0.0
    %605 = vmatpush1.msra.mxu0 0.0
    %606 = vmatprep.subr.mxu0 0.0
    %607 = vmatpush1.msra.mxu0 0.0
    %608 = vmatprep.subr.mxu0 0.0
    %609 = vmatpush1.msra.mxu0 0.0
    %610 = vmatprep.subr.mxu0 0.0
    %611 = vmatpush1.msra.mxu0 0.0
    %612 = vmatprep.subr.mxu0 0.0
    %613 = vmatpush1.msra.mxu0 0.0
    %614 = vmatprep.subr.mxu0 0.0
    %615 = vmatpush1.msra.mxu0 0.0
    %616 = vmatprep.subr.mxu0 0.0
    %617 = vmatpush1.msra.mxu0 0.0
    %618 = vmatprep.subr.mxu0 0.0
    %619 = vmatpush1.msra.mxu0 0.0
    %620 = vmatprep.subr.mxu0 0.0
    %621 = vmatpush1.msra.mxu0 0.0
    %622 = vmatprep.subr.mxu0 0.0
    %623 = vmatpush1.msra.mxu0 0.0
    %624 = vmatprep.subr.mxu0 0.0
    %625 = vmatpush1.msra.mxu0 0.0
    %626 = vmatprep.mubr.f32.mxu0 0.0
    %627 = vmatmul.mubr.f32.gmra.mrb[0].mxu0 %v560
    %v628 = vpop.f32.mrb[0].mxu0
    %v629 = vadd.f32 0.0, %v628
    %v630 = vpop.f32.mrb[0].mxu0
    %631 = vdwg.mxu0
    %v632 = vadd.f32 %v189, %v526
    %v633 = vxor.u32 %v632, 2147483648
    %v634 = vmul.f32 %v633, 1.442695
    %v635 = vpow.pop %v634
    %v636 = vadd.f32 %v635, 1.0
    %v637 = vrcp.pop %v636
    %v638 = vmul.f32 1.0, %v637
    %v639 = vmul.f32 %v638, 2.0
    %v640 = vsub.f32 %v639, 1.0
    %v641 = vmul.f32 %v638, %v447
    %643 = vrot.lane.b32.xlu0 %v640, 32
    %v644 = vpop.permute.xlu0 %643
    %v646 = vmul.f32 %v638, %v644
    %648 = vrot.lane.b32.xlu0 %v646, 32
    %v649 = vpop.permute.xlu0 %648
    %v651 = vadd.f32 %v641, %v649
    %v652 = vtanh.pop %v651
    %654 = vrot.lane.b32.xlu0 %v652, 32
    %v655 = vpop.permute.xlu0 %654
    %v657 = vmul.f32 %v638, %v655
    %659 = vrot.lane.b32.xlu0 %v657, 64
    %v660 = vpop.permute.xlu0 %659
    %v661 = vsel %vm246, %v660, 0
    %663 = vmatprep.subr.mxu0 %v59
    %664 = vmatpush1.msra.mxu0 %v58
    %665 = vmatprep.subr.mxu0 %v61
    %666 = vmatpush1.msra.mxu0 %v60
    %667 = vmatprep.subr.mxu0 %v63
    %668 = vmatpush1.msra.mxu0 %v62
    %669 = vmatprep.subr.mxu0 %v65
    %670 = vmatpush1.msra.mxu0 %v64
    %671 = vmatprep.subr.mxu0 0.0
    %672 = vmatpush1.msra.mxu0 0.0
    %673 = vmatprep.subr.mxu0 0.0
    %674 = vmatpush1.msra.mxu0 0.0
    %675 = vmatprep.subr.mxu0 0.0
    %676 = vmatpush1.msra.mxu0 0.0
    %677 = vmatprep.subr.mxu0 0.0
    %678 = vmatpush1.msra.mxu0 0.0
    %679 = vmatprep.subr.mxu0 0.0
    %680 = vmatpush1.msra.mxu0 0.0
    %681 = vmatprep.subr.mxu0 0.0
    %682 = vmatpush1.msra.mxu0 0.0
    %683 = vmatprep.subr.mxu0 0.0
    %684 = vmatpush1.msra.mxu0 0.0
    %685 = vmatprep.subr.mxu0 0.0
    %686 = vmatpush1.msra.mxu0 0.0
    %687 = vmatprep.subr.mxu0 0.0
    %688 = vmatpush1.msra.mxu0 0.0
    %689 = vmatprep.subr.mxu0 0.0
    %690 = vmatpush1.msra.mxu0 0.0
    %691 = vmatprep.subr.mxu0 0.0
    %692 = vmatpush1.msra.mxu0 0.0
    %693 = vmatprep.subr.mxu0 0.0
    %694 = vmatpush1.msra.mxu0 0.0
    %695 = vmatprep.subr.mxu0 0.0
    %696 = vmatpush1.msra.mxu0 0.0
    %697 = vmatprep.subr.mxu0 0.0
    %698 = vmatpush1.msra.mxu0 0.0
    %699 = vmatprep.subr.mxu0 0.0
    %700 = vmatpush1.msra.mxu0 0.0
    %701 = vmatprep.subr.mxu0 0.0
    %702 = vmatpush1.msra.mxu0 0.0
    %703 = vmatprep.subr.mxu0 0.0
    %704 = vmatpush1.msra.mxu0 0.0
    %705 = vmatprep.subr.mxu0 0.0
    %706 = vmatpush1.msra.mxu0 0.0
    %707 = vmatprep.subr.mxu0 0.0
    %708 = vmatpush1.msra.mxu0 0.0
    %709 = vmatprep.subr.mxu0 0.0
    %710 = vmatpush1.msra.mxu0 0.0
    %711 = vmatprep.subr.mxu0 0.0
    %712 = vmatpush1.msra.mxu0 0.0
    %713 = vmatprep.subr.mxu0 0.0
    %714 = vmatpush1.msra.mxu0 0.0
    %715 = vmatprep.subr.mxu0 0.0
    %716 = vmatpush1.msra.mxu0 0.0
    %717 = vmatprep.subr.mxu0 0.0
    %718 = vmatpush1.msra.mxu0 0.0
    %719 = vmatprep.subr.mxu0 0.0
    %720 = vmatpush1.msra.mxu0 0.0
    %721 = vmatprep.subr.mxu0 0.0
    %722 = vmatpush1.msra.mxu0 0.0
    %723 = vmatprep.subr.mxu0 0.0
    %724 = vmatpush1.msra.mxu0 0.0
    %725 = vmatprep.subr.mxu0 0.0
    %726 = vmatpush1.msra.mxu0 0.0
    %727 = vmatprep.mubr.f32.mxu0 0.0
    %728 = vmatmul.mubr.f32.gmra.mrb[0].mxu0 %v661
    %v729 = vpop.f32.mrb[0].mxu0
    %v730 = vadd.f32 0.0, %v729
    %v731 = vpop.f32.mrb[0].mxu0
    %v732 = vadd.f32 0.0, %v731
    %733 = vdwg.mxu0
    %v734 = vadd.f32 %v732, %v324
    %v735 = vadd.f32 %v734, %v629
    %v736 = vxor.u32 %v735, 2147483648
    %v737 = vmul.f32 %v736, 1.442695
    %v738 = vpow.pop %v737
    %v739 = vadd.f32 %v738, 1.0
    %v740 = vrcp.pop %v739
    %v741 = vmul.f32 1.0, %v740
    %v742 = vmul.f32 %v741, 2.0
    %v743 = vsub.f32 %v742, 1.0
    %v744 = vmul.f32 %v741, %v550
    %746 = vrot.lane.b32.xlu0 %v743, 32
    %v747 = vpop.permute.xlu0 %746
    %v749 = vmul.f32 %v741, %v747
    %751 = vrot.lane.b32.xlu0 %v749, 32
    %v752 = vpop.permute.xlu0 %751
    %v754 = vadd.f32 %v744, %v752
    %v755 = vtanh.pop %v754
    %757 = vrot.lane.b32.xlu0 %v755, 32
    %v758 = vpop.permute.xlu0 %757
    %v760 = vmul.f32 %v741, %v758
    %762 = vrot.lane.b32.xlu0 %v760, 64
    %v763 = vpop.permute.xlu0 %762
    %v764 = vsel %vm246, %v763, 0
    %766 = vmatprep.subr.mxu0 0.0
    %767 = vmatpush1.msra.mxu0 %v66
    %768 = vmatprep.subr.mxu0 0.0
    %769 = vmatpush1.msra.mxu0 %v67
    %770 = vmatprep.subr.mxu0 0.0
    %771 = vmatpush1.msra.mxu0 %v68
    %772 = vmatprep.subr.mxu0 0.0
    %773 = vmatpush1.msra.mxu0 %v69
    %774 = vmatprep.subr.mxu0 0.0
    %775 = vmatpush1.msra.mxu0 0.0
    %776 = vmatprep.subr.mxu0 0.0
    %777 = vmatpush1.msra.mxu0 0.0
    %778 = vmatprep.subr.mxu0 0.0
    %779 = vmatpush1.msra.mxu0 0.0
    %780 = vmatprep.subr.mxu0 0.0
    %781 = vmatpush1.msra.mxu0 0.0
    %782 = vmatprep.subr.mxu0 0.0
    %783 = vmatpush1.msra.mxu0 0.0
    %784 = vmatprep.subr.mxu0 0.0
    %785 = vmatpush1.msra.mxu0 0.0
    %786 = vmatprep.subr.mxu0 0.0
    %787 = vmatpush1.msra.mxu0 0.0
    %788 = vmatprep.subr.mxu0 0.0
    %789 = vmatpush1.msra.mxu0 0.0
    %790 = vmatprep.subr.mxu0 0.0
    %791 = vmatpush1.msra.mxu0 0.0
    %792 = vmatprep.subr.mxu0 0.0
    %793 = vmatpush1.msra.mxu0 0.0
    %794 = vmatprep.subr.mxu0 0.0
    %795 = vmatpush1.msra.mxu0 0.0
    %796 = vmatprep.subr.mxu0 0.0
    %797 = vmatpush1.msra.mxu0 0.0
    %798 = vmatprep.subr.mxu0 0.0
    %799 = vmatpush1.msra.mxu0 0.0
    %800 = vmatprep.subr.mxu0 0.0
    %801 = vmatpush1.msra.mxu0 0.0
    %802 = vmatprep.subr.mxu0 0.0
    %803 = vmatpush1.msra.mxu0 0.0
    %804 = vmatprep.subr.mxu0 0.0
    %805 = vmatpush1.msra.mxu0 0.0
    %806 = vmatprep.subr.mxu0 0.0
    %807 = vmatpush1.msra.mxu0 0.0
    %808 = vmatprep.subr.mxu0 0.0
    %809 = vmatpush1.msra.mxu0 0.0
    %810 = vmatprep.subr.mxu0 0.0
    %811 = vmatpush1.msra.mxu0 0.0
    %812 = vmatprep.subr.mxu0 0.0
    %813 = vmatpush1.msra.mxu0 0.0
    %814 = vmatprep.subr.mxu0 0.0
    %815 = vmatpush1.msra.mxu0 0.0
    %816 = vmatprep.subr.mxu0 0.0
    %817 = vmatpush1.msra.mxu0 0.0
    %818 = vmatprep.subr.mxu0 0.0
    %819 = vmatpush1.msra.mxu0 0.0
    %820 = vmatprep.subr.mxu0 0.0
    %821 = vmatpush1.msra.mxu0 0.0
    %822 = vmatprep.subr.mxu0 0.0
    %823 = vmatpush1.msra.mxu0 0.0
    %824 = vmatprep.subr.mxu0 0.0
    %825 = vmatpush1.msra.mxu0 0.0
    %826 = vmatprep.subr.mxu0 0.0
    %827 = vmatpush1.msra.mxu0 0.0
    %828 = vmatprep.subr.mxu0 0.0
    %829 = vmatpush1.msra.mxu0 0.0
    %830 = vmatprep.mubr.f32.mxu0 0.0
    %831 = vmatmul.mubr.f32.gmra.mrb[0].mxu0 %v764
    %v832 = vpop.f32.mrb[0].mxu0
    %v833 = vadd.f32 0.0, %v832
    %v834 = vpop.f32.mrb[0].mxu0
    %835 = vdwg.mxu0
    %v836 = vadd.f32 %v194, %v730
    %v837 = vxor.u32 %v836, 2147483648
    %v838 = vmul.f32 %v837, 1.442695
    %v839 = vpow.pop %v838
    %v840 = vadd.f32 %v839, 1.0
    %v841 = vrcp.pop %v840
    %v842 = vmul.f32 1.0, %v841
    %v843 = vmul.f32 %v842, 2.0
    %v844 = vsub.f32 %v843, 1.0
    %v845 = vmul.f32 %v842, %v651
    %847 = vrot.lane.b32.xlu0 %v844, 32
    %v848 = vpop.permute.xlu0 %847
    %v850 = vmul.f32 %v842, %v848
    %852 = vrot.lane.b32.xlu0 %v850, 32
    %v853 = vpop.permute.xlu0 %852
    %v855 = vadd.f32 %v845, %v853
    %v856 = vtanh.pop %v855
    %858 = vrot.lane.b32.xlu0 %v856, 32
    %v859 = vpop.permute.xlu0 %858
    %v861 = vmul.f32 %v842, %v859
    %863 = vrot.lane.b32.xlu0 %v861, 64
    %v864 = vpop.permute.xlu0 %863
    %v865 = vsel %vm246, %v864, 0
    %867 = vmatprep.subr.mxu0 %v59
    %868 = vmatpush1.msra.mxu0 %v58
    %869 = vmatprep.subr.mxu0 %v61
    %870 = vmatpush1.msra.mxu0 %v60
    %871 = vmatprep.subr.mxu0 %v63
    %872 = vmatpush1.msra.mxu0 %v62
    %873 = vmatprep.subr.mxu0 %v65
    %874 = vmatpush1.msra.mxu0 %v64
    %875 = vmatprep.subr.mxu0 0.0
    %876 = vmatpush1.msra.mxu0 0.0
    %877 = vmatprep.subr.mxu0 0.0
    %878 = vmatpush1.msra.mxu0 0.0
    %879 = vmatprep.subr.mxu0 0.0
    %880 = vmatpush1.msra.mxu0 0.0
    %881 = vmatprep.subr.mxu0 0.0
    %882 = vmatpush1.msra.mxu0 0.0
    %883 = vmatprep.subr.mxu0 0.0
    %884 = vmatpush1.msra.mxu0 0.0
    %885 = vmatprep.subr.mxu0 0.0
    %886 = vmatpush1.msra.mxu0 0.0
    %887 = vmatprep.subr.mxu0 0.0
    %888 = vmatpush1.msra.mxu0 0.0
    %889 = vmatprep.subr.mxu0 0.0
    %890 = vmatpush1.msra.mxu0 0.0
    %891 = vmatprep.subr.mxu0 0.0
    %892 = vmatpush1.msra.mxu0 0.0
    %893 = vmatprep.subr.mxu0 0.0
    %894 = vmatpush1.msra.mxu0 0.0
    %895 = vmatprep.subr.mxu0 0.0
    %896 = vmatpush1.msra.mxu0 0.0
    %897 = vmatprep.subr.mxu0 0.0
    %898 = vmatpush1.msra.mxu0 0.0
    %899 = vmatprep.subr.mxu0 0.0
    %900 = vmatpush1.msra.mxu0 0.0
    %901 = vmatprep.subr.mxu0 0.0
    %902 = vmatpush1.msra.mxu0 0.0
    %903 = vmatprep.subr.mxu0 0.0
    %904 = vmatpush1.msra.mxu0 0.0
    %905 = vmatprep.subr.mxu0 0.0
    %906 = vmatpush1.msra.mxu0 0.0
    %907 = vmatprep.subr.mxu0 0.0
    %908 = vmatpush1.msra.mxu0 0.0
    %909 = vmatprep.subr.mxu0 0.0
    %910 = vmatpush1.msra.mxu0 0.0
    %911 = vmatprep.subr.mxu0 0.0
    %912 = vmatpush1.msra.mxu0 0.0
    %913 = vmatprep.subr.mxu0 0.0
    %914 = vmatpush1.msra.mxu0 0.0
    %915 = vmatprep.subr.mxu0 0.0
    %916 = vmatpush1.msra.mxu0 0.0
    %917 = vmatprep.subr.mxu0 0.0
    %918 = vmatpush1.msra.mxu0 0.0
    %919 = vmatprep.subr.mxu0 0.0
    %920 = vmatpush1.msra.mxu0 0.0
    %921 = vmatprep.subr.mxu0 0.0
    %922 = vmatpush1.msra.mxu0 0.0
    %923 = vmatprep.subr.mxu0 0.0
    %924 = vmatpush1.msra.mxu0 0.0
    %925 = vmatprep.subr.mxu0 0.0
    %926 = vmatpush1.msra.mxu0 0.0
    %927 = vmatprep.subr.mxu0 0.0
    %928 = vmatpush1.msra.mxu0 0.0
    %929 = vmatprep.subr.mxu0 0.0
    %930 = vmatpush1.msra.mxu0 0.0
    %931 = vmatprep.mubr.f32.mxu0 0.0
    %932 = vmatmul.mubr.f32.gmra.mrb[0].mxu0 %v865
    %v933 = vpop.f32.mrb[0].mxu0
    %v934 = vadd.f32 0.0, %v933
    %v935 = vpop.f32.mrb[0].mxu0
    %v936 = vadd.f32 0.0, %v935
    %937 = vdwg.mxu0
    %v938 = vadd.f32 %v936, %v324
    %v939 = vadd.f32 %v938, %v833
    %v940 = vxor.u32 %v939, 2147483648
    %v941 = vmul.f32 %v940, 1.442695
    %v942 = vpow.pop %v941
    %v943 = vadd.f32 %v942, 1.0
    %v944 = vrcp.pop %v943
    %v945 = vmul.f32 1.0, %v944
    %v946 = vmul.f32 %v945, 2.0
    %v947 = vsub.f32 %v946, 1.0
    %v948 = vmul.f32 %v945, %v754
    %950 = vrot.lane.b32.xlu0 %v947, 32
    %v951 = vpop.permute.xlu0 %950
    %v953 = vmul.f32 %v945, %v951
    %955 = vrot.lane.b32.xlu0 %v953, 32
    %v956 = vpop.permute.xlu0 %955
    %v958 = vadd.f32 %v948, %v956
    %v959 = vtanh.pop %v958
    %961 = vrot.lane.b32.xlu0 %v959, 32
    %v962 = vpop.permute.xlu0 %961
    %v964 = vmul.f32 %v945, %v962
    %966 = vrot.lane.b32.xlu0 %v964, 64
    %v967 = vpop.permute.xlu0 %966
    %v968 = vsel %vm246, %v967, 0
    %970 = vmatprep.subr.mxu0 0.0
    %971 = vmatpush1.msra.mxu0 %v66
    %972 = vmatprep.subr.mxu0 0.0
    %973 = vmatpush1.msra.mxu0 %v67
    %974 = vmatprep.subr.mxu0 0.0
    %975 = vmatpush1.msra.mxu0 %v68
    %976 = vmatprep.subr.mxu0 0.0
    %977 = vmatpush1.msra.mxu0 %v69
    %978 = vmatprep.subr.mxu0 0.0
    %979 = vmatpush1.msra.mxu0 0.0
    %980 = vmatprep.subr.mxu0 0.0
    %981 = vmatpush1.msra.mxu0 0.0
    %982 = vmatprep.subr.mxu0 0.0
    %983 = vmatpush1.msra.mxu0 0.0
    %984 = vmatprep.subr.mxu0 0.0
    %985 = vmatpush1.msra.mxu0 0.0
    %986 = vmatprep.subr.mxu0 0.0
    %987 = vmatpush1.msra.mxu0 0.0
    %988 = vmatprep.subr.mxu0 0.0
    %989 = vmatpush1.msra.mxu0 0.0
    %990 = vmatprep.subr.mxu0 0.0
    %991 = vmatpush1.msra.mxu0 0.0
    %992 = vmatprep.subr.mxu0 0.0
    %993 = vmatpush1.msra.mxu0 0.0
    %994 = vmatprep.subr.mxu0 0.0
    %995 = vmatpush1.msra.mxu0 0.0
    %996 = vmatprep.subr.mxu0 0.0
    %997 = vmatpush1.msra.mxu0 0.0
    %998 = vmatprep.subr.mxu0 0.0
    %999 = vmatpush1.msra.mxu0 0.0
    %1000 = vmatprep.subr.mxu0 0.0
    %1001 = vmatpush1.msra.mxu0 0.0
    %1002 = vmatprep.subr.mxu0 0.0
    %1003 = vmatpush1.msra.mxu0 0.0
    %1004 = vmatprep.subr.mxu0 0.0
    %1005 = vmatpush1.msra.mxu0 0.0
    %1006 = vmatprep.subr.mxu0 0.0
    %1007 = vmatpush1.msra.mxu0 0.0
    %1008 = vmatprep.subr.mxu0 0.0
    %1009 = vmatpush1.msra.mxu0 0.0
    %1010 = vmatprep.subr.mxu0 0.0
    %1011 = vmatpush1.msra.mxu0 0.0
    %1012 = vmatprep.subr.mxu0 0.0
    %1013 = vmatpush1.msra.mxu0 0.0
    %1014 = vmatprep.subr.mxu0 0.0
    %1015 = vmatpush1.msra.mxu0 0.0
    %1016 = vmatprep.subr.mxu0 0.0
    %1017 = vmatpush1.msra.mxu0 0.0
    %1018 = vmatprep.subr.mxu0 0.0
    %1019 = vmatpush1.msra.mxu0 0.0
    %1020 = vmatprep.subr.mxu0 0.0
    %1021 = vmatpush1.msra.mxu0 0.0
    %1022 = vmatprep.subr.mxu0 0.0
    %1023 = vmatpush1.msra.mxu0 0.0
    %1024 = vmatprep.subr.mxu0 0.0
    %1025 = vmatpush1.msra.mxu0 0.0
    %1026 = vmatprep.subr.mxu0 0.0
    %1027 = vmatpush1.msra.mxu0 0.0
    %1028 = vmatprep.subr.mxu0 0.0
    %1029 = vmatpush1.msra.mxu0 0.0
    %1030 = vmatprep.subr.mxu0 0.0
    %1031 = vmatpush1.msra.mxu0 0.0
    %1032 = vmatprep.subr.mxu0 0.0
    %1033 = vmatpush1.msra.mxu0 0.0
    %1034 = vmatprep.mubr.f32.mxu0 0.0
    %1035 = vmatmul.mubr.f32.gmra.mrb[0].mxu0 %v968
    %v1036 = vpop.f32.mrb[0].mxu0
    %v1037 = vadd.f32 0.0, %v1036
    %v1038 = vpop.f32.mrb[0].mxu0
    %1039 = vdwg.mxu0
    %v1040 = vadd.f32 %v199, %v934
    %v1041 = vxor.u32 %v1040, 2147483648
    %v1042 = vmul.f32 %v1041, 1.442695
    %v1043 = vpow.pop %v1042
    %v1044 = vadd.f32 %v1043, 1.0
    %v1045 = vrcp.pop %v1044
    %v1046 = vmul.f32 1.0, %v1045
    %v1047 = vmul.f32 %v1046, 2.0
    %v1048 = vsub.f32 %v1047, 1.0
    %v1049 = vmul.f32 %v1046, %v855
    %1051 = vrot.lane.b32.xlu0 %v1048, 32
    %v1052 = vpop.permute.xlu0 %1051
    %v1054 = vmul.f32 %v1046, %v1052
    %1056 = vrot.lane.b32.xlu0 %v1054, 32
    %v1057 = vpop.permute.xlu0 %1056
    %v1059 = vadd.f32 %v1049, %v1057
    %v1060 = vtanh.pop %v1059
    %1062 = vrot.lane.b32.xlu0 %v1060, 32
    %v1063 = vpop.permute.xlu0 %1062
    %v1065 = vmul.f32 %v1046, %v1063
    %1067 = vrot.lane.b32.xlu0 %v1065, 64
    %v1068 = vpop.permute.xlu0 %1067
    %v1069 = vsel %vm246, %v1068, 0
    %1071 = vmatprep.subr.mxu0 %v59
    %1072 = vmatpush1.msra.mxu0 %v58
    %1073 = vmatprep.subr.mxu0 %v61
    %1074 = vmatpush1.msra.mxu0 %v60
    %1075 = vmatprep.subr.mxu0 %v63
    %1076 = vmatpush1.msra.mxu0 %v62
    %1077 = vmatprep.subr.mxu0 %v65
    %1078 = vmatpush1.msra.mxu0 %v64
    %1079 = vmatprep.subr.mxu0 0.0
    %1080 = vmatpush1.msra.mxu0 0.0
    %1081 = vmatprep.subr.mxu0 0.0
    %1082 = vmatpush1.msra.mxu0 0.0
    %1083 = vmatprep.subr.mxu0 0.0
    %1084 = vmatpush1.msra.mxu0 0.0
    %1085 = vmatprep.subr.mxu0 0.0
    %1086 = vmatpush1.msra.mxu0 0.0
    %1087 = vmatprep.subr.mxu0 0.0
    %1088 = vmatpush1.msra.mxu0 0.0
    %1089 = vmatprep.subr.mxu0 0.0
    %1090 = vmatpush1.msra.mxu0 0.0
    %1091 = vmatprep.subr.mxu0 0.0
    %1092 = vmatpush1.msra.mxu0 0.0
    %1093 = vmatprep.subr.mxu0 0.0
    %1094 = vmatpush1.msra.mxu0 0.0
    %1095 = vmatprep.subr.mxu0 0.0
    %1096 = vmatpush1.msra.mxu0 0.0
    %1097 = vmatprep.subr.mxu0 0.0
    %1098 = vmatpush1.msra.mxu0 0.0
    %1099 = vmatprep.subr.mxu0 0.0
    %1100 = vmatpush1.msra.mxu0 0.0
    %1101 = vmatprep.subr.mxu0 0.0
    %1102 = vmatpush1.msra.mxu0 0.0
    %1103 = vmatprep.subr.mxu0 0.0
    %1104 = vmatpush1.msra.mxu0 0.0
    %1105 = vmatprep.subr.mxu0 0.0
    %1106 = vmatpush1.msra.mxu0 0.0
    %1107 = vmatprep.subr.mxu0 0.0
    %1108 = vmatpush1.msra.mxu0 0.0
    %1109 = vmatprep.subr.mxu0 0.0
    %1110 = vmatpush1.msra.mxu0 0.0
    %1111 = vmatprep.subr.mxu0 0.0
    %1112 = vmatpush1.msra.mxu0 0.0
    %1113 = vmatprep.subr.mxu0 0.0
    %1114 = vmatpush1.msra.mxu0 0.0
    %1115 = vmatprep.subr.mxu0 0.0
    %1116 = vmatpush1.msra.mxu0 0.0
    %1117 = vmatprep.subr.mxu0 0.0
    %1118 = vmatpush1.msra.mxu0 0.0
    %1119 = vmatprep.subr.mxu0 0.0
    %1120 = vmatpush1.msra.mxu0 0.0
    %1121 = vmatprep.subr.mxu0 0.0
    %1122 = vmatpush1.msra.mxu0 0.0
    %1123 = vmatprep.subr.mxu0 0.0
    %1124 = vmatpush1.msra.mxu0 0.0
    %1125 = vmatprep.subr.mxu0 0.0
    %1126 = vmatpush1.msra.mxu0 0.0
    %1127 = vmatprep.subr.mxu0 0.0
    %1128 = vmatpush1.msra.mxu0 0.0
    %1129 = vmatprep.subr.mxu0 0.0
    %1130 = vmatpush1.msra.mxu0 0.0
    %1131 = vmatprep.subr.mxu0 0.0
    %1132 = vmatpush1.msra.mxu0 0.0
    %1133 = vmatprep.subr.mxu0 0.0
    %1134 = vmatpush1.msra.mxu0 0.0
    %1135 = vmatprep.mubr.f32.mxu0 0.0
    %1136 = vmatmul.mubr.f32.gmra.mrb[0].mxu0 %v1069
    %v1137 = vpop.f32.mrb[0].mxu0
    %v1138 = vadd.f32 0.0, %v1137
    %v1139 = vpop.f32.mrb[0].mxu0
    %v1140 = vadd.f32 0.0, %v1139
    %1141 = vdwg.mxu0
    %v1142 = vadd.f32 %v1140, %v324
    %v1143 = vadd.f32 %v1142, %v1037
    %v1144 = vxor.u32 %v1143, 2147483648
    %v1145 = vmul.f32 %v1144, 1.442695
    %v1146 = vpow.pop %v1145
    %v1147 = vadd.f32 %v1146, 1.0
    %v1148 = vrcp.pop %v1147
    %v1149 = vmul.f32 1.0, %v1148
    %v1150 = vmul.f32 %v1149, 2.0
    %v1151 = vsub.f32 %v1150, 1.0
    %v1152 = vmul.f32 %v1149, %v958
    %1154 = vrot.lane.b32.xlu0 %v1151, 32
    %v1155 = vpop.permute.xlu0 %1154
    %v1157 = vmul.f32 %v1149, %v1155
    %1159 = vrot.lane.b32.xlu0 %v1157, 32
    %v1160 = vpop.permute.xlu0 %1159
    %v1162 = vadd.f32 %v1152, %v1160
    %v1163 = vtanh.pop %v1162
    %1165 = vrot.lane.b32.xlu0 %v1163, 32
    %v1166 = vpop.permute.xlu0 %1165
    %v1168 = vmul.f32 %v1149, %v1166
    %1170 = vrot.lane.b32.xlu0 %v1168, 64
    %v1171 = vpop.permute.xlu0 %1170
    %v1172 = vsel %vm246, %v1171, 0
    %1174 = vmatprep.subr.mxu0 0.0
    %1175 = vmatpush1.msra.mxu0 %v66
    %1176 = vmatprep.subr.mxu0 0.0
    %1177 = vmatpush1.msra.mxu0 %v67
    %1178 = vmatprep.subr.mxu0 0.0
    %1179 = vmatpush1.msra.mxu0 %v68
    %1180 = vmatprep.subr.mxu0 0.0
    %1181 = vmatpush1.msra.mxu0 %v69
    %1182 = vmatprep.subr.mxu0 0.0
    %1183 = vmatpush1.msra.mxu0 0.0
    %1184 = vmatprep.subr.mxu0 0.0
    %1185 = vmatpush1.msra.mxu0 0.0
    %1186 = vmatprep.subr.mxu0 0.0
    %1187 = vmatpush1.msra.mxu0 0.0
    %1188 = vmatprep.subr.mxu0 0.0
    %1189 = vmatpush1.msra.mxu0 0.0
    %1190 = vmatprep.subr.mxu0 0.0
    %1191 = vmatpush1.msra.mxu0 0.0
    %1192 = vmatprep.subr.mxu0 0.0
    %1193 = vmatpush1.msra.mxu0 0.0
    %1194 = vmatprep.subr.mxu0 0.0
    %1195 = vmatpush1.msra.mxu0 0.0
    %1196 = vmatprep.subr.mxu0 0.0
    %1197 = vmatpush1.msra.mxu0 0.0
    %1198 = vmatprep.subr.mxu0 0.0
    %1199 = vmatpush1.msra.mxu0 0.0
    %1200 = vmatprep.subr.mxu0 0.0
    %1201 = vmatpush1.msra.mxu0 0.0
    %1202 = vmatprep.subr.mxu0 0.0
    %1203 = vmatpush1.msra.mxu0 0.0
    %1204 = vmatprep.subr.mxu0 0.0
    %1205 = vmatpush1.msra.mxu0 0.0
    %1206 = vmatprep.subr.mxu0 0.0
    %1207 = vmatpush1.msra.mxu0 0.0
    %1208 = vmatprep.subr.mxu0 0.0
    %1209 = vmatpush1.msra.mxu0 0.0
    %1210 = vmatprep.subr.mxu0 0.0
    %1211 = vmatpush1.msra.mxu0 0.0
    %1212 = vmatprep.subr.mxu0 0.0
    %1213 = vmatpush1.msra.mxu0 0.0
    %1214 = vmatprep.subr.mxu0 0.0
    %1215 = vmatpush1.msra.mxu0 0.0
    %1216 = vmatprep.subr.mxu0 0.0
    %1217 = vmatpush1.msra.mxu0 0.0
    %1218 = vmatprep.subr.mxu0 0.0
    %1219 = vmatpush1.msra.mxu0 0.0
    %1220 = vmatprep.subr.mxu0 0.0
    %1221 = vmatpush1.msra.mxu0 0.0
    %1222 = vmatprep.subr.mxu0 0.0
    %1223 = vmatpush1.msra.mxu0 0.0
    %1224 = vmatprep.subr.mxu0 0.0
    %1225 = vmatpush1.msra.mxu0 0.0
    %1226 = vmatprep.subr.mxu0 0.0
    %1227 = vmatpush1.msra.mxu0 0.0
    %1228 = vmatprep.subr.mxu0 0.0
    %1229 = vmatpush1.msra.mxu0 0.0
    %1230 = vmatprep.subr.mxu0 0.0
    %1231 = vmatpush1.msra.mxu0 0.0
    %1232 = vmatprep.subr.mxu0 0.0
    %1233 = vmatpush1.msra.mxu0 0.0
    %1234 = vmatprep.subr.mxu0 0.0
    %1235 = vmatpush1.msra.mxu0 0.0
    %1236 = vmatprep.subr.mxu0 0.0
    %1237 = vmatpush1.msra.mxu0 0.0
    %1238 = vmatprep.mubr.f32.mxu0 0.0
    %1239 = vmatmul.mubr.f32.gmra.mrb[0].mxu0 %v1172
    %v1240 = vpop.f32.mrb[0].mxu0
    %v1241 = vadd.f32 0.0, %v1240
    %v1242 = vpop.f32.mrb[0].mxu0
    %1243 = vdwg.mxu0
    %v1244 = vadd.f32 %v204, %v1138
    %v1245 = vxor.u32 %v1244, 2147483648
    %v1246 = vmul.f32 %v1245, 1.442695
    %v1247 = vpow.pop %v1246
    %v1248 = vadd.f32 %v1247, 1.0
    %v1249 = vrcp.pop %v1248
    %v1250 = vmul.f32 1.0, %v1249
    %v1251 = vmul.f32 %v1250, 2.0
    %v1252 = vsub.f32 %v1251, 1.0
    %v1253 = vmul.f32 %v1250, %v1059
    %1255 = vrot.lane.b32.xlu0 %v1252, 32
    %v1256 = vpop.permute.xlu0 %1255
    %v1258 = vmul.f32 %v1250, %v1256
    %1260 = vrot.lane.b32.xlu0 %v1258, 32
    %v1261 = vpop.permute.xlu0 %1260
    %v1263 = vadd.f32 %v1253, %v1261
    %v1264 = vtanh.pop %v1263
    %1266 = vrot.lane.b32.xlu0 %v1264, 32
    %v1267 = vpop.permute.xlu0 %1266
    %v1269 = vmul.f32 %v1250, %v1267
    %1271 = vrot.lane.b32.xlu0 %v1269, 64
    %v1272 = vpop.permute.xlu0 %1271
    %v1273 = vsel %vm246, %v1272, 0
    %1275 = vmatprep.subr.mxu0 %v59
    %1276 = vmatpush1.msra.mxu0 %v58
    %1277 = vmatprep.subr.mxu0 %v61
    %1278 = vmatpush1.msra.mxu0 %v60
    %1279 = vmatprep.subr.mxu0 %v63
    %1280 = vmatpush1.msra.mxu0 %v62
    %1281 = vmatprep.subr.mxu0 %v65
    %1282 = vmatpush1.msra.mxu0 %v64
    %1283 = vmatprep.subr.mxu0 0.0
    %1284 = vmatpush1.msra.mxu0 0.0
    %1285 = vmatprep.subr.mxu0 0.0
    %1286 = vmatpush1.msra.mxu0 0.0
    %1287 = vmatprep.subr.mxu0 0.0
    %1288 = vmatpush1.msra.mxu0 0.0
    %1289 = vmatprep.subr.mxu0 0.0
    %1290 = vmatpush1.msra.mxu0 0.0
    %1291 = vmatprep.subr.mxu0 0.0
    %1292 = vmatpush1.msra.mxu0 0.0
    %1293 = vmatprep.subr.mxu0 0.0
    %1294 = vmatpush1.msra.mxu0 0.0
    %1295 = vmatprep.subr.mxu0 0.0
    %1296 = vmatpush1.msra.mxu0 0.0
    %1297 = vmatprep.subr.mxu0 0.0
    %1298 = vmatpush1.msra.mxu0 0.0
    %1299 = vmatprep.subr.mxu0 0.0
    %1300 = vmatpush1.msra.mxu0 0.0
    %1301 = vmatprep.subr.mxu0 0.0
    %1302 = vmatpush1.msra.mxu0 0.0
    %1303 = vmatprep.subr.mxu0 0.0
    %1304 = vmatpush1.msra.mxu0 0.0
    %1305 = vmatprep.subr.mxu0 0.0
    %1306 = vmatpush1.msra.mxu0 0.0
    %1307 = vmatprep.subr.mxu0 0.0
    %1308 = vmatpush1.msra.mxu0 0.0
    %1309 = vmatprep.subr.mxu0 0.0
    %1310 = vmatpush1.msra.mxu0 0.0
    %1311 = vmatprep.subr.mxu0 0.0
    %1312 = vmatpush1.msra.mxu0 0.0
    %1313 = vmatprep.subr.mxu0 0.0
    %1314 = vmatpush1.msra.mxu0 0.0
    %1315 = vmatprep.subr.mxu0 0.0
    %1316 = vmatpush1.msra.mxu0 0.0
    %1317 = vmatprep.subr.mxu0 0.0
    %1318 = vmatpush1.msra.mxu0 0.0
    %1319 = vmatprep.subr.mxu0 0.0
    %1320 = vmatpush1.msra.mxu0 0.0
    %1321 = vmatprep.subr.mxu0 0.0
    %1322 = vmatpush1.msra.mxu0 0.0
    %1323 = vmatprep.subr.mxu0 0.0
    %1324 = vmatpush1.msra.mxu0 0.0
    %1325 = vmatprep.subr.mxu0 0.0
    %1326 = vmatpush1.msra.mxu0 0.0
    %1327 = vmatprep.subr.mxu0 0.0
    %1328 = vmatpush1.msra.mxu0 0.0
    %1329 = vmatprep.subr.mxu0 0.0
    %1330 = vmatpush1.msra.mxu0 0.0
    %1331 = vmatprep.subr.mxu0 0.0
    %1332 = vmatpush1.msra.mxu0 0.0
    %1333 = vmatprep.subr.mxu0 0.0
    %1334 = vmatpush1.msra.mxu0 0.0
    %1335 = vmatprep.subr.mxu0 0.0
    %1336 = vmatpush1.msra.mxu0 0.0
    %1337 = vmatprep.subr.mxu0 0.0
    %1338 = vmatpush1.msra.mxu0 0.0
    %1339 = vmatprep.mubr.f32.mxu0 0.0
    %1340 = vmatmul.mubr.f32.gmra.mrb[0].mxu0 %v1273
    %v1341 = vpop.f32.mrb[0].mxu0
    %v1342 = vadd.f32 0.0, %v1341
    %v1343 = vpop.f32.mrb[0].mxu0
    %v1344 = vadd.f32 0.0, %v1343
    %1345 = vdwg.mxu0
    %v1346 = vadd.f32 %v1344, %v324
    %v1347 = vadd.f32 %v1346, %v1241
    %v1348 = vxor.u32 %v1347, 2147483648
    %v1349 = vmul.f32 %v1348, 1.442695
    %v1350 = vpow.pop %v1349
    %v1351 = vadd.f32 %v1350, 1.0
    %v1352 = vrcp.pop %v1351
    %v1353 = vmul.f32 1.0, %v1352
    %v1354 = vmul.f32 %v1353, 2.0
    %v1355 = vsub.f32 %v1354, 1.0
    %v1356 = vmul.f32 %v1353, %v1162
    %1358 = vrot.lane.b32.xlu0 %v1355, 32
    %v1359 = vpop.permute.xlu0 %1358
    %v1361 = vmul.f32 %v1353, %v1359
    %1363 = vrot.lane.b32.xlu0 %v1361, 32
    %v1364 = vpop.permute.xlu0 %1363
    %v1366 = vadd.f32 %v1356, %v1364
    %v1367 = vtanh.pop %v1366
    %1369 = vrot.lane.b32.xlu0 %v1367, 32
    %v1370 = vpop.permute.xlu0 %1369
    %v1372 = vmul.f32 %v1353, %v1370
    %1374 = vrot.lane.b32.xlu0 %v1372, 64
    %v1375 = vpop.permute.xlu0 %1374
    %v1376 = vsel %vm246, %v1375, 0
    %1378 = vmatprep.subr.mxu0 0.0
    %1379 = vmatpush1.msra.mxu0 %v66
    %1380 = vmatprep.subr.mxu0 0.0
    %1381 = vmatpush1.msra.mxu0 %v67
    %1382 = vmatprep.subr.mxu0 0.0
    %1383 = vmatpush1.msra.mxu0 %v68
    %1384 = vmatprep.subr.mxu0 0.0
    %1385 = vmatpush1.msra.mxu0 %v69
    %1386 = vmatprep.subr.mxu0 0.0
    %1387 = vmatpush1.msra.mxu0 0.0
    %1388 = vmatprep.subr.mxu0 0.0
    %1389 = vmatpush1.msra.mxu0 0.0
    %1390 = vmatprep.subr.mxu0 0.0
    %1391 = vmatpush1.msra.mxu0 0.0
    %1392 = vmatprep.subr.mxu0 0.0
    %1393 = vmatpush1.msra.mxu0 0.0
    %1394 = vmatprep.subr.mxu0 0.0
    %1395 = vmatpush1.msra.mxu0 0.0
    %1396 = vmatprep.subr.mxu0 0.0
    %1397 = vmatpush1.msra.mxu0 0.0
    %1398 = vmatprep.subr.mxu0 0.0
    %1399 = vmatpush1.msra.mxu0 0.0
    %1400 = vmatprep.subr.mxu0 0.0
    %1401 = vmatpush1.msra.mxu0 0.0
    %1402 = vmatprep.subr.mxu0 0.0
    %1403 = vmatpush1.msra.mxu0 0.0
    %1404 = vmatprep.subr.mxu0 0.0
    %1405 = vmatpush1.msra.mxu0 0.0
    %1406 = vmatprep.subr.mxu0 0.0
    %1407 = vmatpush1.msra.mxu0 0.0
    %1408 = vmatprep.subr.mxu0 0.0
    %1409 = vmatpush1.msra.mxu0 0.0
    %1410 = vmatprep.subr.mxu0 0.0
    %1411 = vmatpush1.msra.mxu0 0.0
    %1412 = vmatprep.subr.mxu0 0.0
    %1413 = vmatpush1.msra.mxu0 0.0
    %1414 = vmatprep.subr.mxu0 0.0
    %1415 = vmatpush1.msra.mxu0 0.0
    %1416 = vmatprep.subr.mxu0 0.0
    %1417 = vmatpush1.msra.mxu0 0.0
    %1418 = vmatprep.subr.mxu0 0.0
    %1419 = vmatpush1.msra.mxu0 0.0
    %1420 = vmatprep.subr.mxu0 0.0
    %1421 = vmatpush1.msra.mxu0 0.0
    %1422 = vmatprep.subr.mxu0 0.0
    %1423 = vmatpush1.msra.mxu0 0.0
    %1424 = vmatprep.subr.mxu0 0.0
    %1425 = vmatpush1.msra.mxu0 0.0
    %1426 = vmatprep.subr.mxu0 0.0
    %1427 = vmatpush1.msra.mxu0 0.0
    %1428 = vmatprep.subr.mxu0 0.0
    %1429 = vmatpush1.msra.mxu0 0.0
    %1430 = vmatprep.subr.mxu0 0.0
    %1431 = vmatpush1.msra.mxu0 0.0
    %1432 = vmatprep.subr.mxu0 0.0
    %1433 = vmatpush1.msra.mxu0 0.0
    %1434 = vmatprep.subr.mxu0 0.0
    %1435 = vmatpush1.msra.mxu0 0.0
    %1436 = vmatprep.subr.mxu0 0.0
    %1437 = vmatpush1.msra.mxu0 0.0
    %1438 = vmatprep.subr.mxu0 0.0
    %1439 = vmatpush1.msra.mxu0 0.0
    %1440 = vmatprep.subr.mxu0 0.0
    %1441 = vmatpush1.msra.mxu0 0.0
    %1442 = vmatprep.mubr.f32.mxu0 0.0
    %1443 = vmatmul.mubr.f32.gmra.mrb[0].mxu0 %v1376
    %v1444 = vpop.f32.mrb[0].mxu0
    %v1445 = vadd.f32 0.0, %v1444
    %v1446 = vpop.f32.mrb[0].mxu0
    %1447 = vdwg.mxu0
    %v1448 = vadd.f32 %v209, %v1342
    %v1449 = vxor.u32 %v1448, 2147483648
    %v1450 = vmul.f32 %v1449, 1.442695
    %v1451 = vpow.pop %v1450
    %v1452 = vadd.f32 %v1451, 1.0
    %v1453 = vrcp.pop %v1452
    %v1454 = vmul.f32 1.0, %v1453
    %v1455 = vmul.f32 %v1454, 2.0
    %v1456 = vsub.f32 %v1455, 1.0
    %v1457 = vmul.f32 %v1454, %v1263
    %1459 = vrot.lane.b32.xlu0 %v1456, 32
    %v1460 = vpop.permute.xlu0 %1459
    %v1462 = vmul.f32 %v1454, %v1460
    %1464 = vrot.lane.b32.xlu0 %v1462, 32
    %v1465 = vpop.permute.xlu0 %1464
    %v1467 = vadd.f32 %v1457, %v1465
    %v1468 = vtanh.pop %v1467
    %1470 = vrot.lane.b32.xlu0 %v1468, 32
    %v1471 = vpop.permute.xlu0 %1470
    %v1473 = vmul.f32 %v1454, %v1471
    %1475 = vrot.lane.b32.xlu0 %v1473, 64
    %v1476 = vpop.permute.xlu0 %1475
    %v1477 = vsel %vm246, %v1476, 0
    %1479 = vmatprep.subr.mxu0 %v59
    %1480 = vmatpush1.msra.mxu0 %v58
    %1481 = vmatprep.subr.mxu0 %v61
    %1482 = vmatpush1.msra.mxu0 %v60
    %1483 = vmatprep.subr.mxu0 %v63
    %1484 = vmatpush1.msra.mxu0 %v62
    %1485 = vmatprep.subr.mxu0 %v65
    %1486 = vmatpush1.msra.mxu0 %v64
    %1487 = vmatprep.subr.mxu0 0.0
    %1488 = vmatpush1.msra.mxu0 0.0
    %1489 = vmatprep.subr.mxu0 0.0
    %1490 = vmatpush1.msra.mxu0 0.0
    %1491 = vmatprep.subr.mxu0 0.0
    %1492 = vmatpush1.msra.mxu0 0.0
    %1493 = vmatprep.subr.mxu0 0.0
    %1494 = vmatpush1.msra.mxu0 0.0
    %1495 = vmatprep.subr.mxu0 0.0
    %1496 = vmatpush1.msra.mxu0 0.0
    %1497 = vmatprep.subr.mxu0 0.0
    %1498 = vmatpush1.msra.mxu0 0.0
    %1499 = vmatprep.subr.mxu0 0.0
    %1500 = vmatpush1.msra.mxu0 0.0
    %1501 = vmatprep.subr.mxu0 0.0
    %1502 = vmatpush1.msra.mxu0 0.0
    %1503 = vmatprep.subr.mxu0 0.0
    %1504 = vmatpush1.msra.mxu0 0.0
    %1505 = vmatprep.subr.mxu0 0.0
    %1506 = vmatpush1.msra.mxu0 0.0
    %1507 = vmatprep.subr.mxu0 0.0
    %1508 = vmatpush1.msra.mxu0 0.0
    %1509 = vmatprep.subr.mxu0 0.0
    %1510 = vmatpush1.msra.mxu0 0.0
    %1511 = vmatprep.subr.mxu0 0.0
    %1512 = vmatpush1.msra.mxu0 0.0
    %1513 = vmatprep.subr.mxu0 0.0
    %1514 = vmatpush1.msra.mxu0 0.0
    %1515 = vmatprep.subr.mxu0 0.0
    %1516 = vmatpush1.msra.mxu0 0.0
    %1517 = vmatprep.subr.mxu0 0.0
    %1518 = vmatpush1.msra.mxu0 0.0
    %1519 = vmatprep.subr.mxu0 0.0
    %1520 = vmatpush1.msra.mxu0 0.0
    %1521 = vmatprep.subr.mxu0 0.0
    %1522 = vmatpush1.msra.mxu0 0.0
    %1523 = vmatprep.subr.mxu0 0.0
    %1524 = vmatpush1.msra.mxu0 0.0
    %1525 = vmatprep.subr.mxu0 0.0
    %1526 = vmatpush1.msra.mxu0 0.0
    %1527 = vmatprep.subr.mxu0 0.0
    %1528 = vmatpush1.msra.mxu0 0.0
    %1529 = vmatprep.subr.mxu0 0.0
    %1530 = vmatpush1.msra.mxu0 0.0
    %1531 = vmatprep.subr.mxu0 0.0
    %1532 = vmatpush1.msra.mxu0 0.0
    %1533 = vmatprep.subr.mxu0 0.0
    %1534 = vmatpush1.msra.mxu0 0.0
    %1535 = vmatprep.subr.mxu0 0.0
    %1536 = vmatpush1.msra.mxu0 0.0
    %1537 = vmatprep.subr.mxu0 0.0
    %1538 = vmatpush1.msra.mxu0 0.0
    %1539 = vmatprep.subr.mxu0 0.0
    %1540 = vmatpush1.msra.mxu0 0.0
    %1541 = vmatprep.subr.mxu0 0.0
    %1542 = vmatpush1.msra.mxu0 0.0
    %1543 = vmatprep.mubr.f32.mxu0 0.0
    %1544 = vmatmul.mubr.f32.gmra.mrb[0].mxu0 %v1477
    %v1545 = vpop.f32.mrb[0].mxu0
    %v1546 = vadd.f32 0.0, %v1545
    %v1547 = vpop.f32.mrb[0].mxu0
    %v1548 = vadd.f32 0.0, %v1547
    %1549 = vdwg.mxu0
    %v1550 = vadd.f32 %v1548, %v324
    %v1551 = vadd.f32 %v1550, %v1445
    %v1552 = vxor.u32 %v1551, 2147483648
    %v1553 = vmul.f32 %v1552, 1.442695
    %v1554 = vpow.pop %v1553
    %v1555 = vadd.f32 %v1554, 1.0
    %v1556 = vrcp.pop %v1555
    %v1557 = vmul.f32 1.0, %v1556
    %v1558 = vmul.f32 %v1557, 2.0
    %v1559 = vsub.f32 %v1558, 1.0
    %v1560 = vmul.f32 %v1557, %v1366
    %1562 = vrot.lane.b32.xlu0 %v1559, 32
    %v1563 = vpop.permute.xlu0 %1562
    %v1565 = vmul.f32 %v1557, %v1563
    %1567 = vrot.lane.b32.xlu0 %v1565, 32
    %v1568 = vpop.permute.xlu0 %1567
    %v1570 = vadd.f32 %v1560, %v1568
    %v1571 = vtanh.pop %v1570
    %1573 = vrot.lane.b32.xlu0 %v1571, 32
    %v1574 = vpop.permute.xlu0 %1573
    %v1576 = vmul.f32 %v1557, %v1574
    %1578 = vrot.lane.b32.xlu0 %v1576, 64
    %v1579 = vpop.permute.xlu0 %1578
    %v1580 = vsel %vm246, %v1579, 0
    %1582 = vmatprep.subr.mxu0 0.0
    %1583 = vmatpush1.msra.mxu0 %v66
    %1584 = vmatprep.subr.mxu0 0.0
    %1585 = vmatpush1.msra.mxu0 %v67
    %1586 = vmatprep.subr.mxu0 0.0
    %1587 = vmatpush1.msra.mxu0 %v68
    %1588 = vmatprep.subr.mxu0 0.0
    %1589 = vmatpush1.msra.mxu0 %v69
    %1590 = vmatprep.subr.mxu0 0.0
    %1591 = vmatpush1.msra.mxu0 0.0
    %1592 = vmatprep.subr.mxu0 0.0
    %1593 = vmatpush1.msra.mxu0 0.0
    %1594 = vmatprep.subr.mxu0 0.0
    %1595 = vmatpush1.msra.mxu0 0.0
    %1596 = vmatprep.subr.mxu0 0.0
    %1597 = vmatpush1.msra.mxu0 0.0
    %1598 = vmatprep.subr.mxu0 0.0
    %1599 = vmatpush1.msra.mxu0 0.0
    %1600 = vmatprep.subr.mxu0 0.0
    %1601 = vmatpush1.msra.mxu0 0.0
    %1602 = vmatprep.subr.mxu0 0.0
    %1603 = vmatpush1.msra.mxu0 0.0
    %1604 = vmatprep.subr.mxu0 0.0
    %1605 = vmatpush1.msra.mxu0 0.0
    %1606 = vmatprep.subr.mxu0 0.0
    %1607 = vmatpush1.msra.mxu0 0.0
    %1608 = vmatprep.subr.mxu0 0.0
    %1609 = vmatpush1.msra.mxu0 0.0
    %1610 = vmatprep.subr.mxu0 0.0
    %1611 = vmatpush1.msra.mxu0 0.0
    %1612 = vmatprep.subr.mxu0 0.0
    %1613 = vmatpush1.msra.mxu0 0.0
    %1614 = vmatprep.subr.mxu0 0.0
    %1615 = vmatpush1.msra.mxu0 0.0
    %1616 = vmatprep.subr.mxu0 0.0
    %1617 = vmatpush1.msra.mxu0 0.0
    %1618 = vmatprep.subr.mxu0 0.0
    %1619 = vmatpush1.msra.mxu0 0.0
    %1620 = vmatprep.subr.mxu0 0.0
    %1621 = vmatpush1.msra.mxu0 0.0
    %1622 = vmatprep.subr.mxu0 0.0
    %1623 = vmatpush1.msra.mxu0 0.0
    %1624 = vmatprep.subr.mxu0 0.0
    %1625 = vmatpush1.msra.mxu0 0.0
    %1626 = vmatprep.subr.mxu0 0.0
    %1627 = vmatpush1.msra.mxu0 0.0
    %1628 = vmatprep.subr.mxu0 0.0
    %1629 = vmatpush1.msra.mxu0 0.0
    %1630 = vmatprep.subr.mxu0 0.0
    %1631 = vmatpush1.msra.mxu0 0.0
    %1632 = vmatprep.subr.mxu0 0.0
    %1633 = vmatpush1.msra.mxu0 0.0
    %1634 = vmatprep.subr.mxu0 0.0
    %1635 = vmatpush1.msra.mxu0 0.0
    %1636 = vmatprep.subr.mxu0 0.0
    %1637 = vmatpush1.msra.mxu0 0.0
    %1638 = vmatprep.subr.mxu0 0.0
    %1639 = vmatpush1.msra.mxu0 0.0
    %1640 = vmatprep.subr.mxu0 0.0
    %1641 = vmatpush1.msra.mxu0 0.0
    %1642 = vmatprep.subr.mxu0 0.0
    %1643 = vmatpush1.msra.mxu0 0.0
    %1644 = vmatprep.subr.mxu0 0.0
    %1645 = vmatpush1.msra.mxu0 0.0
    %1646 = vmatprep.mubr.f32.mxu0 0.0
    %1647 = vmatmul.mubr.f32.gmra.mrb[0].mxu0 %v1580
    %v1648 = vpop.f32.mrb[0].mxu0
    %v1649 = vadd.f32 0.0, %v1648
    %v1650 = vpop.f32.mrb[0].mxu0
    %1651 = vdwg.mxu0
    %v1652 = vadd.f32 %v214, %v1546
    %v1653 = vxor.u32 %v1652, 2147483648
    %v1654 = vmul.f32 %v1653, 1.442695
    %v1655 = vpow.pop %v1654
    %v1656 = vadd.f32 %v1655, 1.0
    %v1657 = vrcp.pop %v1656
    %v1658 = vmul.f32 1.0, %v1657
    %v1659 = vmul.f32 %v1658, 2.0
    %v1660 = vsub.f32 %v1659, 1.0
    %v1661 = vmul.f32 %v1658, %v1467
    %1663 = vrot.lane.b32.xlu0 %v1660, 32
    %v1664 = vpop.permute.xlu0 %1663
    %v1666 = vmul.f32 %v1658, %v1664
    %1668 = vrot.lane.b32.xlu0 %v1666, 32
    %v1669 = vpop.permute.xlu0 %1668
    %v1671 = vadd.f32 %v1661, %v1669
    %v1672 = vtanh.pop %v1671
    %1674 = vrot.lane.b32.xlu0 %v1672, 32
    %v1675 = vpop.permute.xlu0 %1674
    %v1677 = vmul.f32 %v1658, %v1675
    %1679 = vrot.lane.b32.xlu0 %v1677, 64
    %v1680 = vpop.permute.xlu0 %1679
    %v1681 = vsel %vm246, %v1680, 0
    %1683 = vmatprep.subr.mxu0 %v59
    %1684 = vmatpush1.msra.mxu0 %v58
    %1685 = vmatprep.subr.mxu0 %v61
    %1686 = vmatpush1.msra.mxu0 %v60
    %1687 = vmatprep.subr.mxu0 %v63
    %1688 = vmatpush1.msra.mxu0 %v62
    %1689 = vmatprep.subr.mxu0 %v65
    %1690 = vmatpush1.msra.mxu0 %v64
    %1691 = vmatprep.subr.mxu0 0.0
    %1692 = vmatpush1.msra.mxu0 0.0
    %1693 = vmatprep.subr.mxu0 0.0
    %1694 = vmatpush1.msra.mxu0 0.0
    %1695 = vmatprep.subr.mxu0 0.0
    %1696 = vmatpush1.msra.mxu0 0.0
    %1697 = vmatprep.subr.mxu0 0.0
    %1698 = vmatpush1.msra.mxu0 0.0
    %1699 = vmatprep.subr.mxu0 0.0
    %1700 = vmatpush1.msra.mxu0 0.0
    %1701 = vmatprep.subr.mxu0 0.0
    %1702 = vmatpush1.msra.mxu0 0.0
    %1703 = vmatprep.subr.mxu0 0.0
    %1704 = vmatpush1.msra.mxu0 0.0
    %1705 = vmatprep.subr.mxu0 0.0
    %1706 = vmatpush1.msra.mxu0 0.0
    %1707 = vmatprep.subr.mxu0 0.0
    %1708 = vmatpush1.msra.mxu0 0.0
    %1709 = vmatprep.subr.mxu0 0.0
    %1710 = vmatpush1.msra.mxu0 0.0
    %1711 = vmatprep.subr.mxu0 0.0
    %1712 = vmatpush1.msra.mxu0 0.0
    %1713 = vmatprep.subr.mxu0 0.0
    %1714 = vmatpush1.msra.mxu0 0.0
    %1715 = vmatprep.subr.mxu0 0.0
    %1716 = vmatpush1.msra.mxu0 0.0
    %1717 = vmatprep.subr.mxu0 0.0
    %1718 = vmatpush1.msra.mxu0 0.0
    %1719 = vmatprep.subr.mxu0 0.0
    %1720 = vmatpush1.msra.mxu0 0.0
    %1721 = vmatprep.subr.mxu0 0.0
    %1722 = vmatpush1.msra.mxu0 0.0
    %1723 = vmatprep.subr.mxu0 0.0
    %1724 = vmatpush1.msra.mxu0 0.0
    %1725 = vmatprep.subr.mxu0 0.0
    %1726 = vmatpush1.msra.mxu0 0.0
    %1727 = vmatprep.subr.mxu0 0.0
    %1728 = vmatpush1.msra.mxu0 0.0
    %1729 = vmatprep.subr.mxu0 0.0
    %1730 = vmatpush1.msra.mxu0 0.0
    %1731 = vmatprep.subr.mxu0 0.0
    %1732 = vmatpush1.msra.mxu0 0.0
    %1733 = vmatprep.subr.mxu0 0.0
    %1734 = vmatpush1.msra.mxu0 0.0
    %1735 = vmatprep.subr.mxu0 0.0
    %1736 = vmatpush1.msra.mxu0 0.0
    %1737 = vmatprep.subr.mxu0 0.0
    %1738 = vmatpush1.msra.mxu0 0.0
    %1739 = vmatprep.subr.mxu0 0.0
    %1740 = vmatpush1.msra.mxu0 0.0
    %1741 = vmatprep.subr.mxu0 0.0
    %1742 = vmatpush1.msra.mxu0 0.0
    %1743 = vmatprep.subr.mxu0 0.0
    %1744 = vmatpush1.msra.mxu0 0.0
    %1745 = vmatprep.subr.mxu0 0.0
    %1746 = vmatpush1.msra.mxu0 0.0
    %1747 = vmatprep.mubr.f32.mxu0 0.0
    %1748 = vmatmul.mubr.f32.gmra.mrb[0].mxu0 %v1681
    %v1749 = vpop.f32.mrb[0].mxu0
    %v1750 = vpop.f32.mrb[0].mxu0
    %v1751 = vadd.f32 0.0, %v1750
    %1752 = vdwg.mxu0
    %v1753 = vadd.f32 %v1751, %v324
    %v1754 = vadd.f32 %v1753, %v1649
    %v1755 = vxor.u32 %v1754, 2147483648
    %v1756 = vmul.f32 %v1755, 1.442695
    %v1757 = vpow.pop %v1756
    %v1758 = vadd.f32 %v1757, 1.0
    %v1759 = vrcp.pop %v1758
    %v1760 = vmul.f32 1.0, %v1759
    %v1761 = vmul.f32 %v1760, 2.0
    %v1762 = vsub.f32 %v1761, 1.0
    %v1763 = vmul.f32 %v1760, %v1570
    %1765 = vrot.lane.b32.xlu0 %v1762, 32
    %v1766 = vpop.permute.xlu0 %1765
    %v1768 = vmul.f32 %v1760, %v1766
    %1770 = vrot.lane.b32.xlu0 %v1768, 32
    %v1771 = vpop.permute.xlu0 %1770
    %v1773 = vadd.f32 %v1763, %v1771
    %v1774 = vtanh.pop %v1773
    %1776 = vrot.lane.b32.xlu0 %v1774, 32
    %v1777 = vpop.permute.xlu0 %1776
    %v1779 = vmul.f32 %v1760, %v1777
    %v1780 = vld [vmem:[#allocation5] sm:$0xff]
    %v1781 = vld [vmem:[#allocation5 + $0x8] sm:$0xff]
    %v1782 = vld [vmem:[#allocation5 + $0x10] sm:$0xff]
    %v1783 = vld [vmem:[#allocation5 + $0x18] sm:$0xff]
    %v1784 = vld [vmem:[%s7] sm:$0x1]
    %v1786 = vlaneseq
    %v1787 = vshrl.u32 %v1786, 7
    %v1788 = vsub.s32 0, %v1787
    %v1789 = vrot.slane %v1784, %v1788
    %1792 = vrot.lane.b32.xlu0 %v1779, 64
    %v1793 = vpop.permute.xlu0 %1792
    %v1794 = vsel %vm246, %v1793, 0
    %1796 = vmatprep.subr.mxu0 0.0
    %1797 = vmatpush1.msra.mxu0 %v1780
    %1798 = vmatprep.subr.mxu0 0.0
    %1799 = vmatpush1.msra.mxu0 %v1781
    %1800 = vmatprep.subr.mxu0 0.0
    %1801 = vmatpush1.msra.mxu0 %v1782
    %1802 = vmatprep.subr.mxu0 0.0
    %1803 = vmatpush1.msra.mxu0 %v1783
    %1804 = vmatprep.subr.mxu0 0.0
    %1805 = vmatpush1.msra.mxu0 0.0
    %1806 = vmatprep.subr.mxu0 0.0
    %1807 = vmatpush1.msra.mxu0 0.0
    %1808 = vmatprep.subr.mxu0 0.0
    %1809 = vmatpush1.msra.mxu0 0.0
    %1810 = vmatprep.subr.mxu0 0.0
    %1811 = vmatpush1.msra.mxu0 0.0
    %1812 = vmatprep.subr.mxu0 0.0
    %1813 = vmatpush1.msra.mxu0 0.0
    %1814 = vmatprep.subr.mxu0 0.0
    %1815 = vmatpush1.msra.mxu0 0.0
    %1816 = vmatprep.subr.mxu0 0.0
    %1817 = vmatpush1.msra.mxu0 0.0
    %1818 = vmatprep.subr.mxu0 0.0
    %1819 = vmatpush1.msra.mxu0 0.0
    %1820 = vmatprep.subr.mxu0 0.0
    %1821 = vmatpush1.msra.mxu0 0.0
    %1822 = vmatprep.subr.mxu0 0.0
    %1823 = vmatpush1.msra.mxu0 0.0
    %1824 = vmatprep.subr.mxu0 0.0
    %1825 = vmatpush1.msra.mxu0 0.0
    %1826 = vmatprep.subr.mxu0 0.0
    %1827 = vmatpush1.msra.mxu0 0.0
    %1828 = vmatprep.subr.mxu0 0.0
    %1829 = vmatpush1.msra.mxu0 0.0
    %1830 = vmatprep.subr.mxu0 0.0
    %1831 = vmatpush1.msra.mxu0 0.0
    %1832 = vmatprep.subr.mxu0 0.0
    %1833 = vmatpush1.msra.mxu0 0.0
    %1834 = vmatprep.subr.mxu0 0.0
    %1835 = vmatpush1.msra.mxu0 0.0
    %1836 = vmatprep.subr.mxu0 0.0
    %1837 = vmatpush1.msra.mxu0 0.0
    %1838 = vmatprep.subr.mxu0 0.0
    %1839 = vmatpush1.msra.mxu0 0.0
    %1840 = vmatprep.subr.mxu0 0.0
    %1841 = vmatpush1.msra.mxu0 0.0
    %1842 = vmatprep.subr.mxu0 0.0
    %1843 = vmatpush1.msra.mxu0 0.0
    %1844 = vmatprep.subr.mxu0 0.0
    %1845 = vmatpush1.msra.mxu0 0.0
    %1846 = vmatprep.subr.mxu0 0.0
    %1847 = vmatpush1.msra.mxu0 0.0
    %1848 = vmatprep.subr.mxu0 0.0
    %1849 = vmatpush1.msra.mxu0 0.0
    %1850 = vmatprep.subr.mxu0 0.0
    %1851 = vmatpush1.msra.mxu0 0.0
    %1852 = vmatprep.subr.mxu0 0.0
    %1853 = vmatpush1.msra.mxu0 0.0
    %1854 = vmatprep.subr.mxu0 0.0
    %1855 = vmatpush1.msra.mxu0 0.0
    %1856 = vmatprep.subr.mxu0 0.0
    %1857 = vmatpush1.msra.mxu0 0.0
    %1858 = vmatprep.subr.mxu0 0.0
    %1859 = vmatpush1.msra.mxu0 0.0
    %1860 = vmatprep.mubr.f32.mxu0 0.0
    %1861 = vmatmul.mubr.f32.gmra.mrb[0].mxu0 %v1794
    %v1862 = vpop.f32.mrb[0].mxu0
    %v1863 = vadd.f32 %v1789, %v1862
    %v1864 = vpop.f32.mrb[0].mxu0
    %1865 = vdwg.mxu0
    %1866 = vst [vmem:[#allocation7] sm:$0xff] %v1863
    // Predicated region
    $region42: #{tpu_custom_call.1} parent=1 // pred_check
      _
    $region43: #{tpu_custom_call.1} parent=1 // pred_check_branch
      %1868 = sbr.rel (0) target = $region45
    $region44: #{tpu_custom_call.1} parent=1 // pred_region
      %s1870 = ssub.s32 128, 128
      %1871 = vsyncadd [#allocation4], %s1870
      %s1873 = sshll.u32 [#allocation7], 4
      %s1874 = int_to_ptr.vmem [resolvable:$true] %s1873
      %1876 = dma.vmem_to_hbm [thread:$0]  %s1874, 128, %s8, [#allocation4]
    $region45: #{tpu_custom_call.1} parent=1 // pred_fallthru
      _
    // Predicated region
    $region46: #{tpu_custom_call.1} parent=1 // pred_check
      _
    $region47: #{tpu_custom_call.1} parent=1 // pred_check_branch
      %1878 = sbr.rel (0) target = $region49
    $region48: #{tpu_custom_call.1} parent=1 // pred_region
      %1879 = dma.done [#allocation4], 128
    $region49: #{tpu_custom_call.1} parent=1 // pred_fallthru
      _
    %1880 = vsyncpa [#allocation3], 1
    %1881 = vsyncpa [#allocation6], 1
    %1882 = vsyncpa [#allocation4], 1

</llo_original>
